<compile_context>
chip_gen: v6e
topology: v6e:2x2x1
jax: 0.10.0
libtpu: 0.0.40
codegen_flags: <defaults>
</compile_context>

<pallas_src>
import functools

import jax
import jax.numpy as jnp
from jax.experimental import pallas as pl
from jax.experimental.pallas import tpu as pltpu


def _round_up(x, m):
    return ((x + m - 1) // m) * m


def _ceil_div(a, b):
    return -(-a // b)


# ----------------------------------------------------------------------------
# Phase 1: per-(batch, split) partial online softmax of
#          (g * scale) @ K^T over the L axis, accumulated against V.
# Heads are batched: gs is block-diagonal (HG, HE), so one (HG x HE x TLk)
# matmul scores all heads at once and one (HG x TLk x HE) matmul accumulates
# softmax(scores) @ V.  Partial (acc, m, l) are combined host-side.
# ----------------------------------------------------------------------------
def _guidance_partials_kernel(k_ref, v_ref, gs_ref, acc_ref, m_ref, l_ref, *,
                              L, TLk, nk, masked):
    j = pl.program_id(2)

    @pl.when(j == 0)
    def _init():
        acc_ref[...] = jnp.zeros_like(acc_ref)
        m_ref[...] = jnp.full(m_ref.shape, -1e30, jnp.float32)
        l_ref[...] = jnp.zeros_like(l_ref)

    k = k_ref[...]                                   # (TLk, HE), input dtype
    v = v_ref[...]                                   # (TLk, HE), input dtype
    gs = gs_ref[...]                                 # (HG, HE),  input dtype

    # Scores for every (head, guidance) row against this K tile: MXU-native
    # 128-wide contraction, f32 accumulation.
    s = jax.lax.dot_general(gs, k, (((1,), (1,)), ((), ())),
                            preferred_element_type=jnp.float32)   # (HG, TLk)

    m_prev = m_ref[...]                              # (HG, 1)
    m_new = jnp.maximum(m_prev, jnp.max(s, axis=-1, keepdims=True))
    corr = jnp.exp(m_prev - m_new)                   # (HG, 1)
    p = jnp.exp(s - m_new)                           # (HG, TLk), f32

    if masked:
        # Zero out contributions from host-side L padding (last tile only, but
        # the select is cheap and this phase is HBM-bound).
        start = (pl.program_id(1) * nk + j) * TLk
        col = jax.lax.broadcasted_iota(jnp.int32, s.shape, 1) + start
        p = jnp.where(col < L, p, 0.0)

    l_ref[...] = corr * l_ref[...] + jnp.sum(p, axis=-1, keepdims=True)
    # Contraction over the big L axis; operands stay in the input dtype.
    acc_ref[...] = corr * acc_ref[...] + jnp.dot(
        p.astype(v.dtype), v, preferred_element_type=jnp.float32)
    m_ref[...] = m_new


# ----------------------------------------------------------------------------
# Phase 2: x = per-head softmax(Q @ (g*scale)^T) @ guidance_v, parallel over
# (B, L tiles).  gv and the validity mask are block-diagonal (HG, HE), so the
# numerator and denominator are both lane-dense 128-wide matmuls; the shared
# row-max stabilizer cancels exactly in the ratio.
# ----------------------------------------------------------------------------
def _query_kernel(q_ref, gs_ref, gv_ref, bd_ref, o_ref):
    q = q_ref[...]                                   # (TLq, HE), input dtype
    gs = gs_ref[...]                                 # (HG, HE),  input dtype
    gv = gv_ref[...]                                 # (HG, HE),  input dtype
    bd = bd_ref[...]                                 # (HG, HE),  f32 validity

    s = jax.lax.dot_general(q, gs, (((1,), (1,)), ((), ())),
                            preferred_element_type=jnp.float32)   # (TLq, HG)
    # Global row max is only an overflow stabilizer (it cancels in num/den);
    # per-head normalization comes from the block-diagonal gv / bd operands.
    m = jnp.max(s, axis=-1, keepdims=True)
    p = jnp.exp(s - m)                               # (TLq, HG), f32

    num = jnp.dot(p.astype(gv.dtype), gv, preferred_element_type=jnp.float32)
    den = jnp.dot(p, bd, preferred_element_type=jnp.float32)      # (TLq, HE)
    o_ref[...] = (num / den).astype(o_ref.dtype)


def fourier_attention(queries, keys, values, guidance_tokens, mask=None, *,
                      guidance_num=25, q_tile=2048, kv_tile=2048, kv_splits=1):
    """Pallas implementation of FourierAttention.forward.

    queries/keys/values: (B, L, H, E); guidance_tokens reshapeable to
    (B, guidance_num, H, E); mask is ignored (matches the reference).
    kv_splits > 1 splits the phase-1 L reduction across a parallel grid axis
    (useful on v7x when B is small).  Returns (x, None), x: (B, L, H, E).
    """
    del mask  # the reference module ignores it
    B, L, H, E = queries.shape
    G = guidance_num
    HE = H * E
    Gp = max(8, _round_up(G, 8))          # pad guidance count per head to 8
    HG = H * Gp
    dt = queries.dtype
    scale = float(H) ** -0.5              # matches the PyTorch module (H, not E)

    # Free, contiguous reshapes: big tensors keep their native HBM layout with
    # a lane-dense H*E minor dimension.
    q2 = queries.reshape(B, L, HE)
    k2 = keys.reshape(B, L, HE)
    v2 = values.reshape(B, L, HE)

    # Tiny guidance tensor -> block-diagonal (B, HG, HE), scale folded in.
    g4 = guidance_tokens.reshape(B, G, H, E).astype(dt)
    g4 = jnp.transpose(g4, (0, 2, 1, 3)) * jnp.asarray(scale, dt)   # (B,H,G,E)
    if Gp != G:
        g4 = jnp.pad(g4, ((0, 0), (0, 0), (0, Gp - G), (0, 0)))
    eye_h = jnp.eye(H, dtype=dt)
    gs_bd = jnp.einsum('bhge,hk->bhgke', g4, eye_h).reshape(B, HG, HE)

    # Block-diagonal validity mask: 1 where (row head == col head) and the row
    # is a real (non-padded) guidance token.  Shared by the phase-1 combine and
    # the phase-2 softmax denominator.
    row = jnp.arange(HG)
    col = jnp.arange(HE)
    bd_mask = ((row[:, None] // Gp == col[None, :] // E)
               & ((row[:, None] % Gp) < G)).astype(jnp.float32)     # (HG, HE)

    # ---------------- Phase 1 geometry: tiles + reduction splits -------------
    TLk = min(_round_up(kv_tile, 8), _round_up(L, 8))
    nk_total = _ceil_div(L, TLk)
    S = max(1, min(int(kv_splits), nk_total))
    nk = _ceil_div(nk_total, S)
    Lk_pad = S * nk * TLk
    kk2 = jnp.pad(k2, ((0, 0), (0, Lk_pad - L), (0, 0))) if Lk_pad != L else k2
    vv2 = jnp.pad(v2, ((0, 0), (0, Lk_pad - L), (0, 0))) if Lk_pad != L else v2

    acc_p, m_p, l_p = pl.pallas_call(
        functools.partial(_guidance_partials_kernel, L=L, TLk=TLk, nk=nk,
                          masked=(Lk_pad != L)),
        out_shape=(jax.ShapeDtypeStruct((B, S, HG, HE), jnp.float32),
                   jax.ShapeDtypeStruct((B, S, HG, 1), jnp.float32),
                   jax.ShapeDtypeStruct((B, S, HG, 1), jnp.float32)),
        grid=(B, S, nk),
        in_specs=[
            pl.BlockSpec((None, TLk, HE), lambda b, s, j: (b, s * nk + j, 0)),
            pl.BlockSpec((None, TLk, HE), lambda b, s, j: (b, s * nk + j, 0)),
            pl.BlockSpec((None, HG, HE), lambda b, s, j: (b, 0, 0)),
        ],
        out_specs=(
            pl.BlockSpec((None, None, HG, HE), lambda b, s, j: (b, s, 0, 0)),
            pl.BlockSpec((None, None, HG, 1), lambda b, s, j: (b, s, 0, 0)),
            pl.BlockSpec((None, None, HG, 1), lambda b, s, j: (b, s, 0, 0)),
        ),
        compiler_params=pltpu.CompilerParams(
            dimension_semantics=("parallel", "parallel", "arbitrary")),
    )(kk2, vv2, gs_bd)

    # Tiny exact epilogue in plain JAX (B*S*HG*HE elements): log-sum-exp
    # combine of the split partials, exact division, block-diagonal masking,
    # and cast of guidance_v to the input dtype for phase 2's MXU.
    m_tot = jnp.max(m_p, axis=1, keepdims=True)                  # (B,1,HG,1)
    coef = jnp.exp(m_p - m_tot)                                  # (B,S,HG,1)
    l_tot = jnp.sum(coef * l_p, axis=1)                          # (B,HG,1)
    acc_tot = jnp.sum(coef * acc_p, axis=1)                      # (B,HG,HE)
    gv_bd = ((acc_tot / l_tot) * bd_mask[None]).astype(dt)       # (B,HG,HE)

    # ---------------- Phase 2: fully parallel over (B, L tiles) --------------
    TLq = min(_round_up(q_tile, 8), _round_up(L, 8))
    nq = _ceil_div(L, TLq)
    Lq_pad = nq * TLq
    qq2 = jnp.pad(q2, ((0, 0), (0, Lq_pad - L), (0, 0))) if Lq_pad != L else q2

    x2 = pl.pallas_call(
        _query_kernel,
        out_shape=jax.ShapeDtypeStruct((B, Lq_pad, HE), dt),
        grid=(B, nq),
        in_specs=[
            pl.BlockSpec((None, TLq, HE), lambda b, i: (b, i, 0)),   # Q
            pl.BlockSpec((None, HG, HE), lambda b, i: (b, 0, 0)),    # gs_bd
            pl.BlockSpec((None, HG, HE), lambda b, i: (b, 0, 0)),    # gv_bd
            pl.BlockSpec((HG, HE), lambda b, i: (0, 0)),             # bd_mask
        ],
        out_specs=pl.BlockSpec((None, TLq, HE), lambda b, i: (b, i, 0)),
        compiler_params=pltpu.CompilerParams(
            dimension_semantics=("parallel", "parallel")),
    )(qq2, gs_bd, gv_bd, bd_mask)

    x = x2[:, :L].reshape(B, L, H, E)     # drop L padding; free reshape back
    return x, None


def _reference(queries, keys, values, guidance_tokens, guidance_num=25):
    # Pure-JAX mirror of the PyTorch forward (for correctness checking).
    B, L, H, E = queries.shape
    scale = float(H) ** -0.5
    q = jnp.transpose(queries, (0, 2, 1, 3))
    k = jnp.transpose(keys, (0, 2, 1, 3))
    v = jnp.transpose(values, (0, 2, 1, 3))
    g = jnp.transpose(guidance_tokens.reshape(B, guidance_num, H, E),
                      (0, 2, 1, 3))
    ga = jax.nn.softmax((g * scale) @ jnp.swapaxes(k, -2, -1), axis=-1)
    gv = ga @ v
    qa = jax.nn.softmax((q * scale) @ jnp.swapaxes(g, -2, -1), axis=-1)
    x = qa @ gv
    return jnp.transpose(x, (0, 2, 1, 3))


if __name__ == "__main__":
    B, L, H, E, G = 2, 32, 4, 32, 25
    key = jax.random.PRNGKey(0)
    kq, kk, kv, kg = jax.random.split(key, 4)
    queries = jax.random.normal(kq, (B, L, H, E), dtype=jnp.float32)
    keys = jax.random.normal(kk, (B, L, H, E), dtype=jnp.float32)
    values = jax.random.normal(kv, (B, L, H, E), dtype=jnp.float32)
    guidance = jax.random.normal(kg, (B, G, H * E), dtype=jnp.float32)

    ref = _reference(queries, keys, values, guidance, guidance_num=G)

    # 1) Default config: single K/V and Q tiles, no splits, no padding.
    out, attn = fourier_attention(queries, keys, values, guidance, mask=None,
                                  guidance_num=G)
    out = jax.block_until_ready(out)
    assert attn is None and out.shape == (B, L, H, E)
    err = float(jnp.max(jnp.abs(out - ref)))
    assert err < 1e-4, f"default config: max abs err {err}"

    # 2) Multi-tile + split-reduction + tail-masking paths: L not a multiple of
    #    the K/V tile, kv_splits=2 (exercises the v7x two-core phase-1 split).
    L2 = 30
    q_s, k_s, v_s = queries[:, :L2], keys[:, :L2], values[:, :L2]
    ref2 = _reference(q_s, k_s, v_s, guidance, guidance_num=G)
    out2, _ = fourier_attention(q_s, k_s, v_s, guidance, mask=None,
                                guidance_num=G, q_tile=16, kv_tile=8,
                                kv_splits=2)
    out2 = jax.block_until_ready(out2)
    assert out2.shape == (B, L2, H, E)
    err2 = float(jnp.max(jnp.abs(out2 - ref2)))
    assert err2 < 1e-4, f"tiled/split config: max abs err {err2}"

    print("KERNEL_OK")
</pallas_src>

<mosaic_0001>
module attributes {stable_mosaic.version = 11 : i64} {
  func.func @_guidance_partials_kernel(%arg0: i32, %arg1: i32, %arg2: i32, %arg3: memref<1x32x128xf32, #tpu.memory_space<vmem>>, %arg4: memref<1x32x128xf32, #tpu.memory_space<vmem>>, %arg5: memref<1x128x128xf32, #tpu.memory_space<vmem>>, %arg6: memref<1x1x128x128xf32, #tpu.memory_space<vmem>>, %arg7: memref<1x1x128x1xf32, #tpu.memory_space<vmem>>, %arg8: memref<1x1x128x1xf32, #tpu.memory_space<vmem>>) attributes {dimension_semantics = [#tpu.dimension_semantics<parallel>, #tpu.dimension_semantics<parallel>, #tpu.dimension_semantics<arbitrary>], iteration_bounds = array<i64: 2, 1, 1>, scalar_prefetch = 0 : i64, scratch_operands = 0 : i64, tpu.core_type = #tpu.core_type<tc>, window_params = [{transform_indices = @transform_0, window_bounds = array<i64: 1, 32, 128>}, {transform_indices = @transform_1, window_bounds = array<i64: 1, 32, 128>}, {transform_indices = @transform_2, window_bounds = array<i64: 1, 128, 128>}, {transform_indices = @transform_3, window_bounds = array<i64: 1, 1, 128, 128>}, {transform_indices = @transform_4, window_bounds = array<i64: 1, 1, 128, 1>}, {transform_indices = @transform_5, window_bounds = array<i64: 1, 1, 128, 1>}]} {
    %c0_i32 = arith.constant 0 : i32
    %0 = arith.cmpi eq, %arg2, %c0_i32 : i32
    %1 = arith.extui %0 : i1 to i32
    %c0_i32_0 = arith.constant 0 : i32
    %2 = arith.cmpi ne, %1, %c0_i32_0 : i32
    scf.if %2 {
      %cst_36 = arith.constant 0.000000e+00 : f32
      %41 = vector.broadcast %cst_36 : f32 to vector<128x128xf32>
      %c0_37 = arith.constant 0 : index
      %c0_38 = arith.constant 0 : index
      %c0_39 = arith.constant 0 : index
      %c0_40 = arith.constant 0 : index
      %42 = vector.load %arg6[%c0_37, %c0_38, %c0_39, %c0_40] : memref<1x1x128x128xf32, #tpu.memory_space<vmem>>, vector<1x1x128x128xf32>
      %43 = vector.shape_cast %42 : vector<1x1x128x128xf32> to vector<128x128xf32>
      %44 = vector.shape_cast %41 : vector<128x128xf32> to vector<1x1x128x128xf32>
      tpu.vector_store %arg6[%c0_37, %c0_38, %c0_39, %c0_40], %44 {strides = array<i32>} : memref<1x1x128x128xf32, #tpu.memory_space<vmem>>, vector<1x1x128x128xf32>,
      %cst_41 = arith.constant -1.000000e+30 : f32
      %45 = vector.broadcast %cst_41 : f32 to vector<128x1xf32>
      %c0_42 = arith.constant 0 : index
      %c0_43 = arith.constant 0 : index
      %c0_44 = arith.constant 0 : index
      %c0_45 = arith.constant 0 : index
      %46 = vector.load %arg7[%c0_42, %c0_43, %c0_44, %c0_45] : memref<1x1x128x1xf32, #tpu.memory_space<vmem>>, vector<1x1x128x1xf32>
      %47 = vector.shape_cast %46 : vector<1x1x128x1xf32> to vector<128x1xf32>
      %48 = vector.shape_cast %45 : vector<128x1xf32> to vector<1x1x128x1xf32>
      tpu.vector_store %arg7[%c0_42, %c0_43, %c0_44, %c0_45], %48 {strides = array<i32>} : memref<1x1x128x1xf32, #tpu.memory_space<vmem>>, vector<1x1x128x1xf32>,
      %cst_46 = arith.constant 0.000000e+00 : f32
      %49 = vector.broadcast %cst_46 : f32 to vector<128x1xf32>
      %c0_47 = arith.constant 0 : index
      %c0_48 = arith.constant 0 : index
      %c0_49 = arith.constant 0 : index
      %c0_50 = arith.constant 0 : index
      %50 = vector.load %arg8[%c0_47, %c0_48, %c0_49, %c0_50] : memref<1x1x128x1xf32, #tpu.memory_space<vmem>>, vector<1x1x128x1xf32>
      %51 = vector.shape_cast %50 : vector<1x1x128x1xf32> to vector<128x1xf32>
      %52 = vector.shape_cast %49 : vector<128x1xf32> to vector<1x1x128x1xf32>
      tpu.vector_store %arg8[%c0_47, %c0_48, %c0_49, %c0_50], %52 {strides = array<i32>} : memref<1x1x128x1xf32, #tpu.memory_space<vmem>>, vector<1x1x128x1xf32>,
    } else {
    }
    %c0 = arith.constant 0 : index
    %c0_1 = arith.constant 0 : index
    %c0_2 = arith.constant 0 : index
    %3 = vector.load %arg3[%c0, %c0_1, %c0_2] : memref<1x32x128xf32, #tpu.memory_space<vmem>>, vector<1x32x128xf32>
    %4 = vector.shape_cast %3 : vector<1x32x128xf32> to vector<32x128xf32>
    %c0_3 = arith.constant 0 : index
    %c0_4 = arith.constant 0 : index
    %c0_5 = arith.constant 0 : index
    %5 = vector.load %arg4[%c0_3, %c0_4, %c0_5] : memref<1x32x128xf32, #tpu.memory_space<vmem>>, vector<1x32x128xf32>
    %6 = vector.shape_cast %5 : vector<1x32x128xf32> to vector<32x128xf32>
    %c0_6 = arith.constant 0 : index
    %c0_7 = arith.constant 0 : index
    %c0_8 = arith.constant 0 : index
    %7 = vector.load %arg5[%c0_6, %c0_7, %c0_8] : memref<1x128x128xf32, #tpu.memory_space<vmem>>, vector<1x128x128xf32>
    %8 = vector.shape_cast %7 : vector<1x128x128xf32> to vector<128x128xf32>
    %cst = arith.constant dense<0.000000e+00> : vector<128x32xf32>
    %9 = tpu.matmul %8, %4, %cst {dimension_numbers = #tpu.dot_dimension_numbers<[1], [1], [0], [0], [0, 0, 1, 0], [], []>} : vector<128x128xf32>, vector<32x128xf32>, vector<128x32xf32> -> vector<128x32xf32>
    %c0_9 = arith.constant 0 : index
    %c0_10 = arith.constant 0 : index
    %c0_11 = arith.constant 0 : index
    %c0_12 = arith.constant 0 : index
    %10 = vector.load %arg7[%c0_9, %c0_10, %c0_11, %c0_12] : memref<1x1x128x1xf32, #tpu.memory_space<vmem>>, vector<1x1x128x1xf32>
    %11 = vector.shape_cast %10 : vector<1x1x128x1xf32> to vector<128x1xf32>
    %cst_13 = arith.constant dense<0xFF800000> : vector<128xf32>
    %12 = vector.multi_reduction <maximumf>, %9, %cst_13 [1] : vector<128x32xf32> to vector<128xf32>
    %13 = vector.shape_cast %12 : vector<128xf32> to vector<128x1xf32>
    %14 = arith.maximumf %11, %13 : vector<128x1xf32>
    %15 = arith.subf %11, %14 : vector<128x1xf32>
    %16 = math.exp %15 : vector<128x1xf32>
    %17 = vector.broadcast %14 : vector<128x1xf32> to vector<128x32xf32>
    %18 = arith.subf %9, %17 : vector<128x32xf32>
    %19 = math.exp %18 : vector<128x32xf32>
    %c0_14 = arith.constant 0 : index
    %c0_15 = arith.constant 0 : index
    %c0_16 = arith.constant 0 : index
    %c0_17 = arith.constant 0 : index
    %20 = vector.load %arg8[%c0_14, %c0_15, %c0_16, %c0_17] : memref<1x1x128x1xf32, #tpu.memory_space<vmem>>, vector<1x1x128x1xf32>
    %21 = vector.shape_cast %20 : vector<1x1x128x1xf32> to vector<128x1xf32>
    %22 = arith.mulf %16, %21 : vector<128x1xf32>
    %cst_18 = arith.constant dense<0.000000e+00> : vector<128xf32>
    %23 = vector.multi_reduction <add>, %19, %cst_18 [1] : vector<128x32xf32> to vector<128xf32>
    %24 = vector.shape_cast %23 : vector<128xf32> to vector<128x1xf32>
    %25 = arith.addf %22, %24 : vector<128x1xf32>
    %c0_19 = arith.constant 0 : index
    %c0_20 = arith.constant 0 : index
    %c0_21 = arith.constant 0 : index
    %c0_22 = arith.constant 0 : index
    %26 = vector.load %arg8[%c0_19, %c0_20, %c0_21, %c0_22] : memref<1x1x128x1xf32, #tpu.memory_space<vmem>>, vector<1x1x128x1xf32>
    %27 = vector.shape_cast %26 : vector<1x1x128x1xf32> to vector<128x1xf32>
    %28 = vector.shape_cast %25 : vector<128x1xf32> to vector<1x1x128x1xf32>
    tpu.vector_store %arg8[%c0_19, %c0_20, %c0_21, %c0_22], %28 {strides = array<i32>} : memref<1x1x128x1xf32, #tpu.memory_space<vmem>>, vector<1x1x128x1xf32>,
    %c0_23 = arith.constant 0 : index
    %c0_24 = arith.constant 0 : index
    %c0_25 = arith.constant 0 : index
    %c0_26 = arith.constant 0 : index
    %29 = vector.load %arg6[%c0_23, %c0_24, %c0_25, %c0_26] : memref<1x1x128x128xf32, #tpu.memory_space<vmem>>, vector<1x1x128x128xf32>
    %30 = vector.shape_cast %29 : vector<1x1x128x128xf32> to vector<128x128xf32>
    %31 = vector.broadcast %16 : vector<128x1xf32> to vector<128x128xf32>
    %32 = arith.mulf %31, %30 : vector<128x128xf32>
    %cst_27 = arith.constant dense<0.000000e+00> : vector<128x128xf32>
    %33 = tpu.matmul %19, %6, %cst_27 {dimension_numbers = #tpu.dot_dimension_numbers<[1], [0], [0], [1], [0, 0, 1, 1], [], []>} : vector<128x32xf32>, vector<32x128xf32>, vector<128x128xf32> -> vector<128x128xf32>
    %34 = arith.addf %32, %33 : vector<128x128xf32>
    %c0_28 = arith.constant 0 : index
    %c0_29 = arith.constant 0 : index
    %c0_30 = arith.constant 0 : index
    %c0_31 = arith.constant 0 : index
    %35 = vector.load %arg6[%c0_28, %c0_29, %c0_30, %c0_31] : memref<1x1x128x128xf32, #tpu.memory_space<vmem>>, vector<1x1x128x128xf32>
    %36 = vector.shape_cast %35 : vector<1x1x128x128xf32> to vector<128x128xf32>
    %37 = vector.shape_cast %34 : vector<128x128xf32> to vector<1x1x128x128xf32>
    tpu.vector_store %arg6[%c0_28, %c0_29, %c0_30, %c0_31], %37 {strides = array<i32>} : memref<1x1x128x128xf32, #tpu.memory_space<vmem>>, vector<1x1x128x128xf32>,
    %c0_32 = arith.constant 0 : index
    %c0_33 = arith.constant 0 : index
    %c0_34 = arith.constant 0 : index
    %c0_35 = arith.constant 0 : index
    %38 = vector.load %arg7[%c0_32, %c0_33, %c0_34, %c0_35] : memref<1x1x128x1xf32, #tpu.memory_space<vmem>>, vector<1x1x128x1xf32>
    %39 = vector.shape_cast %38 : vector<1x1x128x1xf32> to vector<128x1xf32>
    %40 = vector.shape_cast %14 : vector<128x1xf32> to vector<1x1x128x1xf32>
    tpu.vector_store %arg7[%c0_32, %c0_33, %c0_34, %c0_35], %40 {strides = array<i32>} : memref<1x1x128x1xf32, #tpu.memory_space<vmem>>, vector<1x1x128x1xf32>,
    return
  }
  func.func @transform_0(%arg0: i32, %arg1: i32, %arg2: i32) -> (i32, i32, i32) {
    %c1_i32 = arith.constant 1 : i32
    %0 = arith.muli %arg1, %c1_i32 : i32
    %1 = arith.addi %0, %arg2 : i32
    %c0_i32 = arith.constant 0 : i32
    %c0_i32_0 = arith.constant 0 : i32
    return %arg0, %1, %c0_i32 : i32, i32, i32
  }
  func.func @transform_1(%arg0: i32, %arg1: i32, %arg2: i32) -> (i32, i32, i32) {
    %c1_i32 = arith.constant 1 : i32
    %0 = arith.muli %arg1, %c1_i32 : i32
    %1 = arith.addi %0, %arg2 : i32
    %c0_i32 = arith.constant 0 : i32
    %c0_i32_0 = arith.constant 0 : i32
    return %arg0, %1, %c0_i32 : i32, i32, i32
  }
  func.func @transform_2(%arg0: i32, %arg1: i32, %arg2: i32) -> (i32, i32, i32) {
    %c0_i32 = arith.constant 0 : i32
    %c0_i32_0 = arith.constant 0 : i32
    %c0_i32_1 = arith.constant 0 : i32
    return %arg0, %c0_i32, %c0_i32_0 : i32, i32, i32
  }
  func.func @transform_3(%arg0: i32, %arg1: i32, %arg2: i32) -> (i32, i32, i32, i32) {
    %c0_i32 = arith.constant 0 : i32
    %c0_i32_0 = arith.constant 0 : i32
    %c0_i32_1 = arith.constant 0 : i32
    return %arg0, %arg1, %c0_i32, %c0_i32_0 : i32, i32, i32, i32
  }
  func.func @transform_4(%arg0: i32, %arg1: i32, %arg2: i32) -> (i32, i32, i32, i32) {
    %c0_i32 = arith.constant 0 : i32
    %c0_i32_0 = arith.constant 0 : i32
    %c0_i32_1 = arith.constant 0 : i32
    return %arg0, %arg1, %c0_i32, %c0_i32_0 : i32, i32, i32, i32
  }
  func.func @transform_5(%arg0: i32, %arg1: i32, %arg2: i32) -> (i32, i32, i32, i32) {
    %c0_i32 = arith.constant 0 : i32
    %c0_i32_0 = arith.constant 0 : i32
    %c0_i32_1 = arith.constant 0 : i32
    return %arg0, %arg1, %c0_i32, %c0_i32_0 : i32, i32, i32, i32
  }
}

</mosaic_0001>

<llo_original>
// kernel: tpu_custom_call.1
$region0: #{tpu_custom_call.1}
  #allocation0 [shape = 'u32[]', space=smem, size = 0x4, offset = 0x4, fixed_abs, tag = 'smem constant byte address 0x4 - core index']
  #allocation1 [shape = 'u32[144,128]{1,0:T(1,128)}', space=vmem, size = 0x12000, scoped, tag = 'internal scratch']
  %s0 = inlined_call_operand.hbm [shape: f32[2,32,128], index: 0, kind: input, shape index: {}]
  %s1 = inlined_call_operand.hbm [shape: f32[2,32,128], index: 1, kind: input, shape index: {}]
  %s2 = inlined_call_operand.hbm [shape: f32[2,128,128], index: 2, kind: input, shape index: {}]
  %s3 = inlined_call_operand.hbm [shape: f32[2,1,128,128], index: 3, kind: output, shape index: {0}]
  %s4 = inlined_call_operand.vmem [shape: f32[2,1,128,1], index: 4, kind: output, shape index: {1}]
  %s5 = inlined_call_operand.vmem [shape: f32[2,1,128,1], index: 5, kind: output, shape index: {2}]
  %6 = xla_tuple %s3, %s4, %s5
  %s7 = sld [smem:[#allocation0]]
  $region77: #{tpu_custom_call.1} parent=0
    _
  %s9 = ssub.s32 1, %s7
  %s10 = scalar_select 0, %s9, %s7
  $region1: #{tpu_custom_call.1} parent=0
    #allocation2 [shape = 'u8[32768]{0}', space=vmem, size = 0x8000, scoped, tag = 'input window, operand 0']
    #allocation3 [shape = 's32[2]{0}', space=sflag, size = 0x8, scoped, tag = 'scoped memory for tpu_custom_call.1']
    #allocation4 [shape = 's32[2]{0}', space=sflag, size = 0x8, scoped, tag = 'scoped memory for tpu_custom_call.1']
    #allocation5 [shape = 'u8[32768]{0}', space=vmem, size = 0x8000, scoped, tag = 'input window, operand 1']
    #allocation6 [shape = 's32[2]{0}', space=sflag, size = 0x8, scoped, tag = 'scoped memory for tpu_custom_call.1']
    #allocation7 [shape = 'u8[131072]{0}', space=vmem, size = 0x20000, scoped, tag = 'input window, operand 2']
    #allocation8 [shape = 'u8[131072]{0}', space=vmem, size = 0x20000, scoped, tag = 'output window, operand 0']
    %11 = vsyncpa [#allocation3], 0
    %s12 = scalar_lea.sflag [#allocation3], 1
    %13 = vsyncpa %s12, 0
    %14 = vsyncpa [#allocation6], 0
    %s15 = scalar_lea.sflag [#allocation6], 1
    %16 = vsyncpa %s15, 0
    %17 = vsyncpa [#allocation4], 0
    %s18 = scalar_lea.sflag [#allocation4], 1
    %19 = vsyncpa %s18, 0
    loop: start=0, step=1, limit=4
    $region2: #{tpu_custom_call.1} parent=1 // loop_pre_header
      _
    $region3: #{tpu_custom_call.1} parent=1 // loop_header
      %s21 = sphi 0, %s25
      %p22 = scmp.ge.s32.totalorder %s21, 4
      %s28 = sphi 0, %s47
      %s29 = sphi 0, %s43
      %s30 = sphi 0, %s39
      %s31 = sphi 0, %s28
      %s32 = sphi 0, %s29
      %s33 = sphi 0, %s30
      %s34 = sphi 0, %s31
      %s35 = sphi 0, %s32
      %s36 = sphi 0, %s33
      %s54 = sphi 0, %s56
      %s57 = sphi 0, %s54
      %s58 = sphi 0, %s57
      %s74 = sphi 0, %s58
      %s84 = sphi 0, %s86
      %s87 = sphi 0, %s84
      %s88 = sphi 0, %s87
      %s104 = sphi 0, %s88
      %s110 = sphi 0, %s112
      %s113 = sphi 0, %s110
      %s114 = sphi 0, %s113
      %s130 = sphi 0, %s114
      %s138 = sphi 0, %s140
      %s141 = sphi 0, %s138
      %s142 = sphi 0, %s141
      %s158 = sphi 0, %s142
      %s166 = sphi 0, %s168
      %s169 = sphi 0, %s166
      %s170 = sphi 0, %s169
      %s186 = sphi 0, %s170
      %s194 = sphi 0, %s196
      %s197 = sphi 0, %s194
      %s198 = sphi 0, %s197
      %s214 = sphi 0, %s198
    $region4: #{tpu_custom_call.1} parent=1 // loop_header_branch
      %24 = sbr.rel (%p22) target = $region8
    $region5: #{tpu_custom_call.1} parent=1 // loop_body
      %s26 = ssub.s32 %s21, 1
      %s27 = ssub.s32 %s21, 2
      %s37 = sadd.s32 1, %s30
      %p38 = scmp.ge.s32.totalorder %s37, 1
      %s39 = scalar_select %p38, 0, %s37
      %s40 = sadd.s32 1, %s29
      %s41 = scalar_select %p38, %s40, %s29
      %p42 = scmp.ge.s32.totalorder %s41, 1
      %s43 = scalar_select %p42, 0, %s41
      %s44 = sadd.s32 1, %s28
      %s45 = scalar_select %p42, %s44, %s28
      %p46 = scmp.ge.s32.totalorder %s45, 2
      %s47 = scalar_select %p46, 0, %s45
      %s48 = sadd.s32 %s29, %s30
      %s49 = sadd.s32 %s43, %s39
      %s50 = ssub.s32 %s28, %s47
      %s51 = ssub.s32 %s48, %s49
      %s52 = sor.u32 %s50, %s51
      %p53 = scmp.eq.s32.totalorder %s52, 0
      %s55 = sadd.s32 %s54, 1
      %s56 = scalar_select %p53, %s54, %s55
      %p59 = pneg %p53
      %p60 = scmp.eq.s32.totalorder %s21, 1
      %p61 = por %p59, %p60
      %p62 = scmp.ne.s32.totalorder %s54, %s57
      %p63 = scmp.eq.s32.totalorder %s21, 0
      %p64 = por %p62, %p63
      %p65 = scmp.ne.s32.totalorder %s54, %s57
      %p66 = scmp.eq.s32.totalorder %s26, 1
      %p67 = por %p65, %p66
      %p68 = scmp.ne.s32.totalorder %s57, %s58
      %p69 = scmp.eq.s32.totalorder %s26, 0
      %p70 = por %p68, %p69
      %p71 = scmp.ne.s32.totalorder %s57, %s58
      %p72 = scmp.eq.s32.totalorder %s27, 1
      %p73 = por %p71, %p72
      %p75 = scmp.ne.s32.totalorder %s58, %s74
      %p76 = scmp.eq.s32.totalorder %s27, 0
      %p77 = por %p75, %p76
      %s78 = sadd.s32 %s29, %s30
      %s79 = sadd.s32 %s43, %s39
      %s80 = ssub.s32 %s28, %s47
      %s81 = ssub.s32 %s78, %s79
      %s82 = sor.u32 %s80, %s81
      %p83 = scmp.eq.s32.totalorder %s82, 0
      %s85 = sadd.s32 %s84, 1
      %s86 = scalar_select %p83, %s84, %s85
      %p89 = pneg %p83
      %p90 = scmp.eq.s32.totalorder %s21, 1
      %p91 = por %p89, %p90
      %p92 = scmp.ne.s32.totalorder %s84, %s87
      %p93 = scmp.eq.s32.totalorder %s21, 0
      %p94 = por %p92, %p93
      %p95 = scmp.ne.s32.totalorder %s84, %s87
      %p96 = scmp.eq.s32.totalorder %s26, 1
      %p97 = por %p95, %p96
      %p98 = scmp.ne.s32.totalorder %s87, %s88
      %p99 = scmp.eq.s32.totalorder %s26, 0
      %p100 = por %p98, %p99
      %p101 = scmp.ne.s32.totalorder %s87, %s88
      %p102 = scmp.eq.s32.totalorder %s27, 1
      %p103 = por %p101, %p102
      %p105 = scmp.ne.s32.totalorder %s88, %s104
      %p106 = scmp.eq.s32.totalorder %s27, 0
      %p107 = por %p105, %p106
      %s108 = ssub.s32 %s28, %s47
      %p109 = scmp.eq.s32.totalorder %s108, 0
      %s111 = sadd.s32 %s110, 1
      %s112 = scalar_select %p109, %s110, %s111
      %p115 = pneg %p109
      %p116 = scmp.eq.s32.totalorder %s21, 1
      %p117 = por %p115, %p116
      %p118 = scmp.ne.s32.totalorder %s110, %s113
      %p119 = scmp.eq.s32.totalorder %s21, 0
      %p120 = por %p118, %p119
      %p121 = scmp.ne.s32.totalorder %s110, %s113
      %p122 = scmp.eq.s32.totalorder %s26, 1
      %p123 = por %p121, %p122
      %p124 = scmp.ne.s32.totalorder %s113, %s114
      %p125 = scmp.eq.s32.totalorder %s26, 0
      %p126 = por %p124, %p125
      %p127 = scmp.ne.s32.totalorder %s113, %s114
      %p128 = scmp.eq.s32.totalorder %s27, 1
      %p129 = por %p127, %p128
      %p131 = scmp.ne.s32.totalorder %s114, %s130
      %p132 = scmp.eq.s32.totalorder %s27, 0
      %p133 = por %p131, %p132
      %s134 = ssub.s32 %s28, %s47
      %s135 = ssub.s32 %s29, %s43
      %s136 = sor.u32 %s134, %s135
      %p137 = scmp.eq.s32.totalorder %s136, 0
      %s139 = sadd.s32 %s138, 1
      %s140 = scalar_select %p137, %s138, %s139
      %p143 = pneg %p137
      %p144 = scmp.eq.s32.totalorder %s21, 1
      %p145 = por %p143, %p144
      %p146 = scmp.ne.s32.totalorder %s138, %s141
      %p147 = scmp.eq.s32.totalorder %s21, 0
      %p148 = por %p146, %p147
      %p149 = scmp.ne.s32.totalorder %s138, %s141
      %p150 = scmp.eq.s32.totalorder %s26, 1
      %p151 = por %p149, %p150
      %p152 = scmp.ne.s32.totalorder %s141, %s142
      %p153 = scmp.eq.s32.totalorder %s26, 0
      %p154 = por %p152, %p153
      %p155 = scmp.ne.s32.totalorder %s141, %s142
      %p156 = scmp.eq.s32.totalorder %s27, 1
      %p157 = por %p155, %p156
      %p159 = scmp.ne.s32.totalorder %s142, %s158
      %p160 = scmp.eq.s32.totalorder %s27, 0
      %p161 = por %p159, %p160
      %s162 = ssub.s32 %s28, %s47
      %s163 = ssub.s32 %s29, %s43
      %s164 = sor.u32 %s162, %s163
      %p165 = scmp.eq.s32.totalorder %s164, 0
      %s167 = sadd.s32 %s166, 1
      %s168 = scalar_select %p165, %s166, %s167
      %p171 = pneg %p165
      %p172 = scmp.eq.s32.totalorder %s21, 1
      %p173 = por %p171, %p172
      %p174 = scmp.ne.s32.totalorder %s166, %s169
      %p175 = scmp.eq.s32.totalorder %s21, 0
      %p176 = por %p174, %p175
      %p177 = scmp.ne.s32.totalorder %s166, %s169
      %p178 = scmp.eq.s32.totalorder %s26, 1
      %p179 = por %p177, %p178
      %p180 = scmp.ne.s32.totalorder %s169, %s170
      %p181 = scmp.eq.s32.totalorder %s26, 0
      %p182 = por %p180, %p181
      %p183 = scmp.ne.s32.totalorder %s169, %s170
      %p184 = scmp.eq.s32.totalorder %s27, 1
      %p185 = por %p183, %p184
      %p187 = scmp.ne.s32.totalorder %s170, %s186
      %p188 = scmp.eq.s32.totalorder %s27, 0
      %p189 = por %p187, %p188
      %s190 = ssub.s32 %s28, %s47
      %s191 = ssub.s32 %s29, %s43
      %s192 = sor.u32 %s190, %s191
      %p193 = scmp.eq.s32.totalorder %s192, 0
      %s195 = sadd.s32 %s194, 1
      %s196 = scalar_select %p193, %s194, %s195
      %p199 = pneg %p193
      %p200 = scmp.eq.s32.totalorder %s21, 1
      %p201 = por %p199, %p200
      %p202 = scmp.ne.s32.totalorder %s194, %s197
      %p203 = scmp.eq.s32.totalorder %s21, 0
      %p204 = por %p202, %p203
      %p205 = scmp.ne.s32.totalorder %s194, %s197
      %p206 = scmp.eq.s32.totalorder %s26, 1
      %p207 = por %p205, %p206
      %p208 = scmp.ne.s32.totalorder %s197, %s198
      %p209 = scmp.eq.s32.totalorder %s26, 0
      %p210 = por %p208, %p209
      %p211 = scmp.ne.s32.totalorder %s197, %s198
      %p212 = scmp.eq.s32.totalorder %s27, 1
      %p213 = por %p211, %p212
      %p215 = scmp.ne.s32.totalorder %s198, %s214
      %p216 = scmp.eq.s32.totalorder %s27, 0
      %p217 = por %p215, %p216
      %p218 = scmp.le.s32.totalorder 1, %s21
      %p219 = scmp.lt.s32.totalorder %s21, 3
      %p220 = pnand %p218, %p219
      %p221 = pneg %p220
      // Predicated region
      $region9: #{tpu_custom_call.1} parent=5 // pred_check
        _
      $region10: #{tpu_custom_call.1} parent=5 // pred_check_branch
        %223 = sbr.rel (%p220) target = $region12
      $region11: #{tpu_custom_call.1} parent=5 // pred_region
        %s224 = ssub.s32 %s21, 1
      $region12: #{tpu_custom_call.1} parent=5 // pred_fallthru
        _
      %p225 = scmp.lt.s32.totalorder %s21, 2
      // Predicated region
      $region13: #{tpu_custom_call.1} parent=5 // pred_check
        %p226 = pneg %p225
      $region14: #{tpu_custom_call.1} parent=5 // pred_check_branch
        %228 = sbr.rel (%p226) target = $region16
      $region15: #{tpu_custom_call.1} parent=5 // pred_region
        // Predicated region
        $region17: #{tpu_custom_call.1} parent=15 // pred_check
          %p229 = pneg %p64
        $region18: #{tpu_custom_call.1} parent=15 // pred_check_branch
          %231 = sbr.rel (%p229) target = $region20
        $region19: #{tpu_custom_call.1} parent=15 // pred_region
          %s232 = sand.u32 %s54, 1
          %s233 = scalar_lea.sflag [#allocation3], %s232
          %s234 = sand.u32 %s54, 1
          %s235 = smul.addr %s234, 32
          %s236 = scalar_lea.vmem [#allocation2], %s235
          %s237 = sadd.s32 %s29, %s30
          %s238 = smul.u32 4, %s237
          %s240 = ssub.s32 512, 512
          %241 = vsyncadd %s233, %s240
          %s242 = smul.addr %s28, 4
          %s243 = sadd.s32 %s238, %s242
          %s244 = smul.addr %s243, 128
          %s245 = scalar_lea.hbm %s0, %s244
          %s246 = sshll.u32 %s236, 4
          %s247 = int_to_ptr.vmem [resolvable:$true] %s246
          %252 = dma.hbm_to_vmem [thread:$0]  %s245, 512, %s247, %s233, 128, 128, 8
        $region20: #{tpu_custom_call.1} parent=15 // pred_fallthru
          _
        // Predicated region
        $region21: #{tpu_custom_call.1} parent=15 // pred_check
          %p253 = pneg %p94
        $region22: #{tpu_custom_call.1} parent=15 // pred_check_branch
          %255 = sbr.rel (%p253) target = $region24
        $region23: #{tpu_custom_call.1} parent=15 // pred_region
          %s256 = sand.u32 %s21, 1
          %s257 = scalar_lea.sflag [#allocation6], %s256
          %s258 = sand.u32 %s84, 1
          %s259 = smul.addr %s258, 32
          %s260 = scalar_lea.vmem [#allocation5], %s259
          %s261 = sadd.s32 %s29, %s30
          %s262 = smul.u32 4, %s261
          %s264 = ssub.s32 512, 512
          %265 = vsyncadd %s257, %s264
          %s266 = smul.addr %s28, 4
          %s267 = sadd.s32 %s262, %s266
          %s268 = smul.addr %s267, 128
          %s269 = scalar_lea.hbm %s1, %s268
          %s270 = sshll.u32 %s260, 4
          %s271 = int_to_ptr.vmem [resolvable:$true] %s270
          %276 = dma.hbm_to_vmem [thread:$0]  %s269, 512, %s271, %s257, 128, 128, 8
        $region24: #{tpu_custom_call.1} parent=15 // pred_fallthru
          _
        // Predicated region
        $region25: #{tpu_custom_call.1} parent=15 // pred_check
          %p277 = pneg %p120
        $region26: #{tpu_custom_call.1} parent=15 // pred_check_branch
          %279 = sbr.rel (%p277) target = $region28
        $region27: #{tpu_custom_call.1} parent=15 // pred_region
          %s280 = sand.u32 %s21, 1
          %s281 = scalar_lea.sflag [#allocation6], %s280
          %s282 = sand.u32 %s110, 1
          %s283 = smul.addr %s282, 128
          %s284 = scalar_lea.vmem [#allocation7], %s283
          %s286 = ssub.s32 2048, 2048
          %287 = vsyncadd %s281, %s286
          %s288 = smul.addr %s28, 16
          %s289 = smul.addr %s288, 128
          %s290 = scalar_lea.hbm %s2, %s289
          %s291 = sshll.u32 %s284, 4
          %s292 = int_to_ptr.vmem [resolvable:$true] %s291
          %297 = dma.hbm_to_vmem [thread:$0]  %s290, 2048, %s292, %s281, 128, 128, 8
        $region28: #{tpu_custom_call.1} parent=15 // pred_fallthru
          _
      $region16: #{tpu_custom_call.1} parent=5 // pred_fallthru
        _
      %p298 = scmp.le.s32.totalorder 1, %s21
      %p299 = scmp.lt.s32.totalorder %s21, 3
      %p300 = pnand %p298, %p299
      %p301 = pneg %p300
      // Predicated region
      $region29: #{tpu_custom_call.1} parent=5 // pred_check
        _
      $region30: #{tpu_custom_call.1} parent=5 // pred_check_branch
        %303 = sbr.rel (%p300) target = $region32
      $region31: #{tpu_custom_call.1} parent=5 // pred_region
        %s304 = ssub.s32 %s21, 1
        %s305 = sand.u32 %s57, 1
        %s306 = scalar_lea.sflag [#allocation3], %s305
        %s307 = sand.u32 %s57, 1
        %s308 = smul.addr %s307, 32
        %s309 = scalar_lea.vmem [#allocation2], %s308
        // Predicated region
        $region33: #{tpu_custom_call.1} parent=31 // pred_check
          %p310 = pneg %p70
        $region34: #{tpu_custom_call.1} parent=31 // pred_check_branch
          %312 = sbr.rel (%p310) target = $region36
        $region35: #{tpu_custom_call.1} parent=31 // pred_region
          %313 = dma.done %s306, 512
        $region36: #{tpu_custom_call.1} parent=31 // pred_fallthru
          _
        %s314 = sand.u32 %s26, 1
        %s315 = scalar_lea.sflag [#allocation6], %s314
        %s316 = sand.u32 %s87, 1
        %s317 = smul.addr %s316, 32
        %s318 = scalar_lea.vmem [#allocation5], %s317
        // Predicated region
        $region37: #{tpu_custom_call.1} parent=31 // pred_check
          %p319 = pneg %p100
        $region38: #{tpu_custom_call.1} parent=31 // pred_check_branch
          %321 = sbr.rel (%p319) target = $region40
        $region39: #{tpu_custom_call.1} parent=31 // pred_region
          %322 = dma.done %s315, 512
        $region40: #{tpu_custom_call.1} parent=31 // pred_fallthru
          _
        %s323 = sand.u32 %s26, 1
        %s324 = scalar_lea.sflag [#allocation6], %s323
        %s325 = sand.u32 %s113, 1
        %s326 = smul.addr %s325, 128
        %s327 = scalar_lea.vmem [#allocation7], %s326
        // Predicated region
        $region41: #{tpu_custom_call.1} parent=31 // pred_check
          %p328 = pneg %p126
        $region42: #{tpu_custom_call.1} parent=31 // pred_check_branch
          %330 = sbr.rel (%p328) target = $region44
        $region43: #{tpu_custom_call.1} parent=31 // pred_region
          %331 = dma.done %s324, 2048
        $region44: #{tpu_custom_call.1} parent=31 // pred_fallthru
          _
        %s332 = sand.u32 %s57, 1
        %s333 = scalar_lea.sflag [#allocation3], %s332
        %s334 = sand.u32 %s57, 1
        %s335 = smul.addr %s334, 32
        %s336 = scalar_lea.vmem [#allocation2], %s335
        %p337 = pneg %p70
        %p338 = pneg %p67
        %s339 = sand.u32 %s26, 1
        %s340 = scalar_lea.sflag [#allocation6], %s339
        %s341 = sand.u32 %s87, 1
        %s342 = smul.addr %s341, 32
        %s343 = scalar_lea.vmem [#allocation5], %s342
        %p344 = pneg %p100
        %p345 = pneg %p97
        %s346 = sand.u32 %s26, 1
        %s347 = scalar_lea.sflag [#allocation6], %s346
        %s348 = sand.u32 %s113, 1
        %s349 = smul.addr %s348, 128
        %s350 = scalar_lea.vmem [#allocation7], %s349
        %p351 = pneg %p126
        %p352 = pneg %p123
        %p353 = pneg %p154
        %p354 = pneg %p151
        %s355 = sand.u32 %s141, 1
        %s356 = scalar_lea.sflag [#allocation4], %s355
        %s357 = sand.u32 %s141, 1
        %s358 = smul.addr %s357, 128
        %s359 = scalar_lea.vmem [#allocation8], %s358
        %p360 = pneg %p182
        %p361 = pneg %p179
        %p362 = scmp.lt.s32.totalorder %s31, 1
        %s363 = scalar_select %p362, %s31, 1
        %p364 = scmp.lt.s32.totalorder %s32, 0
        %s365 = scalar_select %p364, %s32, 0
        %s366 = smul.addr %s365, 16
        %s367 = smul.addr %s363, 16
        %s368 = sadd.s32 %s366, %s367
        %s369 = smul.addr %s368, 8
        %s370 = scalar_lea.vmem %s4, %s369
        %p371 = pneg %p210
        %p372 = pneg %p207
        %p373 = scmp.lt.s32.totalorder %s31, 1
        %s374 = scalar_select %p373, %s31, 1
        %p375 = scmp.lt.s32.totalorder %s32, 0
        %s376 = scalar_select %p375, %s32, 0
        %s377 = smul.addr %s376, 16
        %s378 = smul.addr %s374, 16
        %s379 = sadd.s32 %s377, %s378
        %s380 = smul.addr %s379, 8
        %s381 = scalar_lea.vmem %s5, %s380
        %s382 = sadd.s32 %s32, %s33
        %s383 = smul.u32 4, %s382
        %s384 = sadd.s32 %s32, %s33
        %s385 = smul.u32 4, %s384
        %p386 = scmp.lt.s32.totalorder %s31, 1
        %s387 = scalar_select %p386, %s31, 1
        %p388 = scmp.lt.s32.totalorder %s32, 0
        %s389 = scalar_select %p388, %s32, 0
        %s390 = smul.addr %s389, 16
        %s391 = smul.addr %s387, 16
        %s392 = sadd.s32 %s390, %s391
        %s393 = smul.addr %s392, 8
        %s394 = scalar_lea.vmem %s4, %s393
        %p395 = scmp.lt.s32.totalorder %s31, 1
        %s396 = scalar_select %p395, %s31, 1
        %p397 = scmp.lt.s32.totalorder %s32, 0
        %s398 = scalar_select %p397, %s32, 0
        %s399 = smul.addr %s398, 16
        %s400 = smul.addr %s396, 16
        %s401 = sadd.s32 %s399, %s400
        %s402 = smul.addr %s401, 8
        %s403 = scalar_lea.vmem %s5, %s402
        %p404 = scmp.eq.s32.totalorder %s33, 0
        // Predicated region
        $region45: #{tpu_custom_call.1} parent=31 // pred_check
          %p405 = pneg %p404
        $region46: #{tpu_custom_call.1} parent=31 // pred_check_branch
          %407 = sbr.rel (%p405) target = $region48
        $region47: #{tpu_custom_call.1} parent=31 // pred_region
          %408 = vst [vmem:[%s359] sm:$0xff] 0.0
          %409 = vst [vmem:[%s359 + $0x8] sm:$0xff] 0.0
          %410 = vst [vmem:[%s359 + $0x10] sm:$0xff] 0.0
          %411 = vst [vmem:[%s359 + $0x18] sm:$0xff] 0.0
          %412 = vst [vmem:[%s359 + $0x20] sm:$0xff] 0.0
          %413 = vst [vmem:[%s359 + $0x28] sm:$0xff] 0.0
          %414 = vst [vmem:[%s359 + $0x30] sm:$0xff] 0.0
          %415 = vst [vmem:[%s359 + $0x38] sm:$0xff] 0.0
          %416 = vst [vmem:[%s359 + $0x40] sm:$0xff] 0.0
          %417 = vst [vmem:[%s359 + $0x48] sm:$0xff] 0.0
          %418 = vst [vmem:[%s359 + $0x50] sm:$0xff] 0.0
          %419 = vst [vmem:[%s359 + $0x58] sm:$0xff] 0.0
          %420 = vst [vmem:[%s359 + $0x60] sm:$0xff] 0.0
          %421 = vst [vmem:[%s359 + $0x68] sm:$0xff] 0.0
          %422 = vst [vmem:[%s359 + $0x70] sm:$0xff] 0.0
          %423 = vst [vmem:[%s359 + $0x78] sm:$0xff] 0.0
          %vm424 = vcmask 7168
          %425 = vst.msk [vmem:[%s394] sm:$0xff] %vm424, -1e+30
          %426 = vst.msk [vmem:[%s394 + $0x8] sm:$0xff] %vm424, -1e+30
          %427 = vst.msk [vmem:[%s394 + $0x10] sm:$0xff] %vm424, -1e+30
          %428 = vst.msk [vmem:[%s394 + $0x18] sm:$0xff] %vm424, -1e+30
          %429 = vst.msk [vmem:[%s394 + $0x20] sm:$0xff] %vm424, -1e+30
          %430 = vst.msk [vmem:[%s394 + $0x28] sm:$0xff] %vm424, -1e+30
          %431 = vst.msk [vmem:[%s394 + $0x30] sm:$0xff] %vm424, -1e+30
          %432 = vst.msk [vmem:[%s394 + $0x38] sm:$0xff] %vm424, -1e+30
          %433 = vst.msk [vmem:[%s394 + $0x40] sm:$0xff] %vm424, -1e+30
          %434 = vst.msk [vmem:[%s394 + $0x48] sm:$0xff] %vm424, -1e+30
          %435 = vst.msk [vmem:[%s394 + $0x50] sm:$0xff] %vm424, -1e+30
          %436 = vst.msk [vmem:[%s394 + $0x58] sm:$0xff] %vm424, -1e+30
          %437 = vst.msk [vmem:[%s394 + $0x60] sm:$0xff] %vm424, -1e+30
          %438 = vst.msk [vmem:[%s394 + $0x68] sm:$0xff] %vm424, -1e+30
          %439 = vst.msk [vmem:[%s394 + $0x70] sm:$0xff] %vm424, -1e+30
          %440 = vst.msk [vmem:[%s394 + $0x78] sm:$0xff] %vm424, -1e+30
          %441 = vst.msk [vmem:[%s403] sm:$0xff] %vm424, 0.0
          %442 = vst.msk [vmem:[%s403 + $0x8] sm:$0xff] %vm424, 0.0
          %443 = vst.msk [vmem:[%s403 + $0x10] sm:$0xff] %vm424, 0.0
          %444 = vst.msk [vmem:[%s403 + $0x18] sm:$0xff] %vm424, 0.0
          %445 = vst.msk [vmem:[%s403 + $0x20] sm:$0xff] %vm424, 0.0
          %446 = vst.msk [vmem:[%s403 + $0x28] sm:$0xff] %vm424, 0.0
          %447 = vst.msk [vmem:[%s403 + $0x30] sm:$0xff] %vm424, 0.0
          %448 = vst.msk [vmem:[%s403 + $0x38] sm:$0xff] %vm424, 0.0
          %449 = vst.msk [vmem:[%s403 + $0x40] sm:$0xff] %vm424, 0.0
          %450 = vst.msk [vmem:[%s403 + $0x48] sm:$0xff] %vm424, 0.0
          %451 = vst.msk [vmem:[%s403 + $0x50] sm:$0xff] %vm424, 0.0
          %452 = vst.msk [vmem:[%s403 + $0x58] sm:$0xff] %vm424, 0.0
          %453 = vst.msk [vmem:[%s403 + $0x60] sm:$0xff] %vm424, 0.0
          %454 = vst.msk [vmem:[%s403 + $0x68] sm:$0xff] %vm424, 0.0
          %455 = vst.msk [vmem:[%s403 + $0x70] sm:$0xff] %vm424, 0.0
          %456 = vst.msk [vmem:[%s403 + $0x78] sm:$0xff] %vm424, 0.0
        $region48: #{tpu_custom_call.1} parent=31 // pred_fallthru
          _
        %v457 = vld [vmem:[%s309] sm:$0xff]
        %v458 = vld [vmem:[%s309 + $0x8] sm:$0xff]
        %v459 = vld [vmem:[%s309 + $0x10] sm:$0xff]
        %v460 = vld [vmem:[%s309 + $0x18] sm:$0xff]
        %v461 = vld [vmem:[%s318] sm:$0xff]
        %v462 = vld [vmem:[%s318 + $0x8] sm:$0xff]
        %v463 = vld [vmem:[%s318 + $0x10] sm:$0xff]
        %v464 = vld [vmem:[%s318 + $0x18] sm:$0xff]
        %v465 = vld [vmem:[%s327] sm:$0xff]
        %v466 = vld [vmem:[%s327 + $0x8] sm:$0xff]
        %v467 = vld [vmem:[%s327 + $0x10] sm:$0xff]
        %v468 = vld [vmem:[%s327 + $0x18] sm:$0xff]
        %v469 = vld [vmem:[%s327 + $0x20] sm:$0xff]
        %v470 = vld [vmem:[%s327 + $0x28] sm:$0xff]
        %v471 = vld [vmem:[%s327 + $0x30] sm:$0xff]
        %v472 = vld [vmem:[%s327 + $0x38] sm:$0xff]
        %v473 = vld [vmem:[%s327 + $0x40] sm:$0xff]
        %v474 = vld [vmem:[%s327 + $0x48] sm:$0xff]
        %v475 = vld [vmem:[%s327 + $0x50] sm:$0xff]
        %v476 = vld [vmem:[%s327 + $0x58] sm:$0xff]
        %v477 = vld [vmem:[%s327 + $0x60] sm:$0xff]
        %v478 = vld [vmem:[%s327 + $0x68] sm:$0xff]
        %v479 = vld [vmem:[%s327 + $0x70] sm:$0xff]
        %v480 = vld [vmem:[%s327 + $0x78] sm:$0xff]
        %481 = vmatprep.subr.mxu0 0.0
        %482 = vmatpush1.xpose.msra.mxu0 0.0
        %483 = vmatprep.subr.mxu0 0.0
        %484 = vmatpush1.xpose.msra.mxu0 0.0
        %485 = vmatprep.subr.mxu0 0.0
        %486 = vmatpush1.xpose.msra.mxu0 0.0
        %487 = vmatprep.subr.mxu0 0.0
        %488 = vmatpush1.xpose.msra.mxu0 0.0
        %489 = vmatprep.subr.mxu0 0.0
        %490 = vmatpush1.xpose.msra.mxu0 0.0
        %491 = vmatprep.subr.mxu0 0.0
        %492 = vmatpush1.xpose.msra.mxu0 0.0
        %493 = vmatprep.subr.mxu0 0.0
        %494 = vmatpush1.xpose.msra.mxu0 0.0
        %495 = vmatprep.subr.mxu0 0.0
        %496 = vmatpush1.xpose.msra.mxu0 0.0
        %497 = vmatprep.subr.mxu0 0.0
        %498 = vmatpush1.xpose.msra.mxu0 0.0
        %499 = vmatprep.subr.mxu0 0.0
        %500 = vmatpush1.xpose.msra.mxu0 0.0
        %501 = vmatprep.subr.mxu0 0.0
        %502 = vmatpush1.xpose.msra.mxu0 0.0
        %503 = vmatprep.subr.mxu0 0.0
        %504 = vmatpush1.xpose.msra.mxu0 0.0
        %505 = vmatprep.subr.mxu0 0.0
        %506 = vmatpush1.xpose.msra.mxu0 %v460
        %507 = vmatprep.subr.mxu0 0.0
        %508 = vmatpush1.xpose.msra.mxu0 %v459
        %509 = vmatprep.subr.mxu0 0.0
        %510 = vmatpush1.xpose.msra.mxu0 %v458
        %511 = vmatprep.subr.mxu0 0.0
        %512 = vmatpush1.xpose.msra.mxu0 %v457
        %513 = vmatprep.subr.mxu0 0.0
        %514 = vmatpush2.xpose.msra.mxu0 0.0
        %515 = vmatprep.subr.mxu0 0.0
        %516 = vmatpush2.xpose.msra.mxu0 0.0
        %517 = vmatprep.subr.mxu0 0.0
        %518 = vmatpush2.xpose.msra.mxu0 0.0
        %519 = vmatprep.subr.mxu0 0.0
        %520 = vmatpush2.xpose.msra.mxu0 0.0
        %521 = vmatprep.subr.mxu0 0.0
        %522 = vmatpush2.xpose.msra.mxu0 0.0
        %523 = vmatprep.subr.mxu0 0.0
        %524 = vmatpush2.xpose.msra.mxu0 0.0
        %525 = vmatprep.subr.mxu0 0.0
        %526 = vmatpush2.xpose.msra.mxu0 0.0
        %527 = vmatprep.subr.mxu0 0.0
        %528 = vmatpush2.xpose.msra.mxu0 0.0
        %529 = vmatprep.subr.mxu0 0.0
        %530 = vmatpush2.xpose.msra.mxu0 0.0
        %531 = vmatprep.subr.mxu0 0.0
        %532 = vmatpush2.xpose.msra.mxu0 0.0
        %533 = vmatprep.subr.mxu0 0.0
        %534 = vmatpush2.xpose.msra.mxu0 0.0
        %535 = vmatprep.subr.mxu0 0.0
        %536 = vmatpush2.xpose.msra.mxu0 0.0
        %537 = vmatprep.subr.mxu0 0.0
        %538 = vmatpush2.xpose.msra.mxu0 0.0
        %539 = vmatprep.subr.mxu0 0.0
        %540 = vmatpush2.xpose.msra.mxu0 0.0
        %541 = vmatprep.subr.mxu0 0.0
        %542 = vmatpush2.xpose.msra.mxu0 0.0
        %543 = vmatprep.subr.mxu0 0.0
        %544 = vmatpush2.xpose.msra.mxu0 0.0
        %545 = vmatprep.mubr.f32.mxu0 0.0
        %546 = vmatmul.mubr.f32.gmra.mxu0 %v465
        %v547 = vpop.f32.mrf.mxu0
        %v548 = vadd.f32 0.0, %v547
        %v549 = vpop.f32.mrf.mxu0
        %550 = vmatprep.mubr.f32.mxu0 0.0
        %551 = vmatmul.mubr.f32.gmra.mxu0 %v466
        %v552 = vpop.f32.mrf.mxu0
        %v553 = vadd.f32 0.0, %v552
        %v554 = vpop.f32.mrf.mxu0
        %555 = vmatprep.mubr.f32.mxu0 0.0
        %556 = vmatmul.mubr.f32.gmra.mxu0 %v467
        %v557 = vpop.f32.mrf.mxu0
        %v558 = vadd.f32 0.0, %v557
        %v559 = vpop.f32.mrf.mxu0
        %560 = vmatprep.mubr.f32.mxu0 0.0
        %561 = vmatmul.mubr.f32.gmra.mxu0 %v468
        %v562 = vpop.f32.mrf.mxu0
        %v563 = vadd.f32 0.0, %v562
        %v564 = vpop.f32.mrf.mxu0
        %565 = vmatprep.mubr.f32.mxu0 0.0
        %566 = vmatmul.mubr.f32.gmra.mxu0 %v469
        %v567 = vpop.f32.mrf.mxu0
        %v568 = vadd.f32 0.0, %v567
        %v569 = vpop.f32.mrf.mxu0
        %570 = vmatprep.mubr.f32.mxu0 0.0
        %571 = vmatmul.mubr.f32.gmra.mxu0 %v470
        %v572 = vpop.f32.mrf.mxu0
        %v573 = vadd.f32 0.0, %v572
        %v574 = vpop.f32.mrf.mxu0
        %575 = vmatprep.mubr.f32.mxu0 0.0
        %576 = vmatmul.mubr.f32.gmra.mxu0 %v471
        %v577 = vpop.f32.mrf.mxu0
        %v578 = vadd.f32 0.0, %v577
        %v579 = vpop.f32.mrf.mxu0
        %580 = vmatprep.mubr.f32.mxu0 0.0
        %581 = vmatmul.mubr.f32.gmra.mxu0 %v472
        %v582 = vpop.f32.mrf.mxu0
        %v583 = vadd.f32 0.0, %v582
        %v584 = vpop.f32.mrf.mxu0
        %585 = vmatprep.mubr.f32.mxu0 0.0
        %586 = vmatmul.mubr.f32.gmra.mxu0 %v473
        %v587 = vpop.f32.mrf.mxu0
        %v588 = vadd.f32 0.0, %v587
        %v589 = vpop.f32.mrf.mxu0
        %590 = vmatprep.mubr.f32.mxu0 0.0
        %591 = vmatmul.mubr.f32.gmra.mxu0 %v474
        %v592 = vpop.f32.mrf.mxu0
        %v593 = vadd.f32 0.0, %v592
        %v594 = vpop.f32.mrf.mxu0
        %595 = vmatprep.mubr.f32.mxu0 0.0
        %596 = vmatmul.mubr.f32.gmra.mxu0 %v475
        %v597 = vpop.f32.mrf.mxu0
        %v598 = vadd.f32 0.0, %v597
        %v599 = vpop.f32.mrf.mxu0
        %600 = vmatprep.mubr.f32.mxu0 0.0
        %601 = vmatmul.mubr.f32.gmra.mxu0 %v476
        %v602 = vpop.f32.mrf.mxu0
        %v603 = vadd.f32 0.0, %v602
        %v604 = vpop.f32.mrf.mxu0
        %605 = vmatprep.mubr.f32.mxu0 0.0
        %606 = vmatmul.mubr.f32.gmra.mxu0 %v477
        %v607 = vpop.f32.mrf.mxu0
        %v608 = vadd.f32 0.0, %v607
        %v609 = vpop.f32.mrf.mxu0
        %610 = vmatprep.mubr.f32.mxu0 0.0
        %611 = vmatmul.mubr.f32.gmra.mxu0 %v478
        %v612 = vpop.f32.mrf.mxu0
        %v613 = vadd.f32 0.0, %v612
        %v614 = vpop.f32.mrf.mxu0
        %615 = vmatprep.mubr.f32.mxu0 0.0
        %616 = vmatmul.mubr.f32.gmra.mxu0 %v479
        %v617 = vpop.f32.mrf.mxu0
        %v618 = vadd.f32 0.0, %v617
        %v619 = vpop.f32.mrf.mxu0
        %620 = vmatprep.mubr.f32.mxu0 0.0
        %621 = vmatmul.mubr.f32.gmra.mxu0 %v480
        %v622 = vpop.f32.mrf.mxu0
        %v623 = vadd.f32 0.0, %v622
        %v624 = vpop.f32.mrf.mxu0
        %625 = vdwg.mxu0
        %v626 = vld [vmem:[%s394] sm:$0xff]
        %v627 = vld [vmem:[%s394 + $0x8] sm:$0xff]
        %v628 = vld [vmem:[%s394 + $0x10] sm:$0xff]
        %v629 = vld [vmem:[%s394 + $0x18] sm:$0xff]
        %v630 = vld [vmem:[%s394 + $0x20] sm:$0xff]
        %v631 = vld [vmem:[%s394 + $0x28] sm:$0xff]
        %v632 = vld [vmem:[%s394 + $0x30] sm:$0xff]
        %v633 = vld [vmem:[%s394 + $0x38] sm:$0xff]
        %v634 = vld [vmem:[%s394 + $0x40] sm:$0xff]
        %v635 = vld [vmem:[%s394 + $0x48] sm:$0xff]
        %v636 = vld [vmem:[%s394 + $0x50] sm:$0xff]
        %v637 = vld [vmem:[%s394 + $0x58] sm:$0xff]
        %v638 = vld [vmem:[%s394 + $0x60] sm:$0xff]
        %v639 = vld [vmem:[%s394 + $0x68] sm:$0xff]
        %v640 = vld [vmem:[%s394 + $0x70] sm:$0xff]
        %v641 = vld [vmem:[%s394 + $0x78] sm:$0xff]
        %vm642 = vcmask 261120
        %v643 = vsel %vm642, %v548, -inf
        %644 = vmax.xlane.f32.xlu0 %v643
        %v645 = vpop.xlane.xlu0 %644
        %v646 = vsel %vm642, %v553, -inf
        %647 = vmax.xlane.f32.xlu0 %v646
        %v648 = vpop.xlane.xlu0 %647
        %v649 = vsel %vm642, %v558, -inf
        %650 = vmax.xlane.f32.xlu0 %v649
        %v651 = vpop.xlane.xlu0 %650
        %v652 = vsel %vm642, %v563, -inf
        %653 = vmax.xlane.f32.xlu0 %v652
        %v654 = vpop.xlane.xlu0 %653
        %v655 = vsel %vm642, %v568, -inf
        %656 = vmax.xlane.f32.xlu0 %v655
        %v657 = vpop.xlane.xlu0 %656
        %v658 = vsel %vm642, %v573, -inf
        %659 = vmax.xlane.f32.xlu0 %v658
        %v660 = vpop.xlane.xlu0 %659
        %v661 = vsel %vm642, %v578, -inf
        %662 = vmax.xlane.f32.xlu0 %v661
        %v663 = vpop.xlane.xlu0 %662
        %v664 = vsel %vm642, %v583, -inf
        %665 = vmax.xlane.f32.xlu0 %v664
        %v666 = vpop.xlane.xlu0 %665
        %v667 = vsel %vm642, %v588, -inf
        %668 = vmax.xlane.f32.xlu0 %v667
        %v669 = vpop.xlane.xlu0 %668
        %v670 = vsel %vm642, %v593, -inf
        %671 = vmax.xlane.f32.xlu0 %v670
        %v672 = vpop.xlane.xlu0 %671
        %v673 = vsel %vm642, %v598, -inf
        %674 = vmax.xlane.f32.xlu0 %v673
        %v675 = vpop.xlane.xlu0 %674
        %v676 = vsel %vm642, %v603, -inf
        %677 = vmax.xlane.f32.xlu0 %v676
        %v678 = vpop.xlane.xlu0 %677
        %v679 = vsel %vm642, %v608, -inf
        %680 = vmax.xlane.f32.xlu0 %v679
        %v681 = vpop.xlane.xlu0 %680
        %v682 = vsel %vm642, %v613, -inf
        %683 = vmax.xlane.f32.xlu0 %v682
        %v684 = vpop.xlane.xlu0 %683
        %v685 = vsel %vm642, %v618, -inf
        %686 = vmax.xlane.f32.xlu0 %v685
        %v687 = vpop.xlane.xlu0 %686
        %v688 = vsel %vm642, %v623, -inf
        %689 = vmax.xlane.f32.xlu0 %v688
        %v690 = vpop.xlane.xlu0 %689
        %v691 = vmax.f32 %v626, %v645
        %v692 = vmax.f32 %v627, %v648
        %v693 = vmax.f32 %v628, %v651
        %v694 = vmax.f32 %v629, %v654
        %v695 = vmax.f32 %v630, %v657
        %v696 = vmax.f32 %v631, %v660
        %v697 = vmax.f32 %v632, %v663
        %v698 = vmax.f32 %v633, %v666
        %v699 = vmax.f32 %v634, %v669
        %v700 = vmax.f32 %v635, %v672
        %v701 = vmax.f32 %v636, %v675
        %v702 = vmax.f32 %v637, %v678
        %v703 = vmax.f32 %v638, %v681
        %v704 = vmax.f32 %v639, %v684
        %v705 = vmax.f32 %v640, %v687
        %v706 = vmax.f32 %v641, %v690
        %v707 = vsub.f32 %v626, %v691
        %v708 = vsub.f32 %v627, %v692
        %v709 = vsub.f32 %v628, %v693
        %v710 = vsub.f32 %v629, %v694
        %v711 = vsub.f32 %v630, %v695
        %v712 = vsub.f32 %v631, %v696
        %v713 = vsub.f32 %v632, %v697
        %v714 = vsub.f32 %v633, %v698
        %v715 = vsub.f32 %v634, %v699
        %v716 = vsub.f32 %v635, %v700
        %v717 = vsub.f32 %v636, %v701
        %v718 = vsub.f32 %v637, %v702
        %v719 = vsub.f32 %v638, %v703
        %v720 = vsub.f32 %v639, %v704
        %v721 = vsub.f32 %v640, %v705
        %v722 = vsub.f32 %v641, %v706
        %v723 = vmul.f32 %v707, 1.442695
        %v724 = vpow.pop %v723
        %v725 = vmul.f32 %v708, 1.442695
        %v726 = vpow.pop %v725
        %v727 = vmul.f32 %v709, 1.442695
        %v728 = vpow.pop %v727
        %v729 = vmul.f32 %v710, 1.442695
        %v730 = vpow.pop %v729
        %v731 = vmul.f32 %v711, 1.442695
        %v732 = vpow.pop %v731
        %v733 = vmul.f32 %v712, 1.442695
        %v734 = vpow.pop %v733
        %v735 = vmul.f32 %v713, 1.442695
        %v736 = vpow.pop %v735
        %v737 = vmul.f32 %v714, 1.442695
        %v738 = vpow.pop %v737
        %v739 = vmul.f32 %v715, 1.442695
        %v740 = vpow.pop %v739
        %v741 = vmul.f32 %v716, 1.442695
        %v742 = vpow.pop %v741
        %v743 = vmul.f32 %v717, 1.442695
        %v744 = vpow.pop %v743
        %v745 = vmul.f32 %v718, 1.442695
        %v746 = vpow.pop %v745
        %v747 = vmul.f32 %v719, 1.442695
        %v748 = vpow.pop %v747
        %v749 = vmul.f32 %v720, 1.442695
        %v750 = vpow.pop %v749
        %v751 = vmul.f32 %v721, 1.442695
        %v752 = vpow.pop %v751
        %v753 = vmul.f32 %v722, 1.442695
        %v754 = vpow.pop %v753
        %756 = vset.pattern.permute.xlu0 0
        %757 = vperm.xlu0 %756, %v691
        %v758 = vpop.permute.xlu0 %757
        %761 = vset.pattern.permute.xlu0 0
        %762 = vperm.xlu0 %761, %v692
        %v763 = vpop.permute.xlu0 %762
        %766 = vset.pattern.permute.xlu0 0
        %767 = vperm.xlu0 %766, %v693
        %v768 = vpop.permute.xlu0 %767
        %771 = vset.pattern.permute.xlu0 0
        %772 = vperm.xlu0 %771, %v694
        %v773 = vpop.permute.xlu0 %772
        %776 = vset.pattern.permute.xlu0 0
        %777 = vperm.xlu0 %776, %v695
        %v778 = vpop.permute.xlu0 %777
        %781 = vset.pattern.permute.xlu0 0
        %782 = vperm.xlu0 %781, %v696
        %v783 = vpop.permute.xlu0 %782
        %786 = vset.pattern.permute.xlu0 0
        %787 = vperm.xlu0 %786, %v697
        %v788 = vpop.permute.xlu0 %787
        %791 = vset.pattern.permute.xlu0 0
        %792 = vperm.xlu0 %791, %v698
        %v793 = vpop.permute.xlu0 %792
        %796 = vset.pattern.permute.xlu0 0
        %797 = vperm.xlu0 %796, %v699
        %v798 = vpop.permute.xlu0 %797
        %801 = vset.pattern.permute.xlu0 0
        %802 = vperm.xlu0 %801, %v700
        %v803 = vpop.permute.xlu0 %802
        %806 = vset.pattern.permute.xlu0 0
        %807 = vperm.xlu0 %806, %v701
        %v808 = vpop.permute.xlu0 %807
        %811 = vset.pattern.permute.xlu0 0
        %812 = vperm.xlu0 %811, %v702
        %v813 = vpop.permute.xlu0 %812
        %816 = vset.pattern.permute.xlu0 0
        %817 = vperm.xlu0 %816, %v703
        %v818 = vpop.permute.xlu0 %817
        %821 = vset.pattern.permute.xlu0 0
        %822 = vperm.xlu0 %821, %v704
        %v823 = vpop.permute.xlu0 %822
        %826 = vset.pattern.permute.xlu0 0
        %827 = vperm.xlu0 %826, %v705
        %v828 = vpop.permute.xlu0 %827
        %831 = vset.pattern.permute.xlu0 0
        %832 = vperm.xlu0 %831, %v706
        %v833 = vpop.permute.xlu0 %832
        %v835 = vsub.f32 %v548, %v758
        %v836 = vsub.f32 %v553, %v763
        %v837 = vsub.f32 %v558, %v768
        %v838 = vsub.f32 %v563, %v773
        %v839 = vsub.f32 %v568, %v778
        %v840 = vsub.f32 %v573, %v783
        %v841 = vsub.f32 %v578, %v788
        %v842 = vsub.f32 %v583, %v793
        %v843 = vsub.f32 %v588, %v798
        %v844 = vsub.f32 %v593, %v803
        %v845 = vsub.f32 %v598, %v808
        %v846 = vsub.f32 %v603, %v813
        %v847 = vsub.f32 %v608, %v818
        %v848 = vsub.f32 %v613, %v823
        %v849 = vsub.f32 %v618, %v828
        %v850 = vsub.f32 %v623, %v833
        %v851 = vmul.f32 %v835, 1.442695
        %v852 = vpow.pop %v851
        %v853 = vmul.f32 %v836, 1.442695
        %v854 = vpow.pop %v853
        %v855 = vmul.f32 %v837, 1.442695
        %v856 = vpow.pop %v855
        %v857 = vmul.f32 %v838, 1.442695
        %v858 = vpow.pop %v857
        %v859 = vmul.f32 %v839, 1.442695
        %v860 = vpow.pop %v859
        %v861 = vmul.f32 %v840, 1.442695
        %v862 = vpow.pop %v861
        %v863 = vmul.f32 %v841, 1.442695
        %v864 = vpow.pop %v863
        %v865 = vmul.f32 %v842, 1.442695
        %v866 = vpow.pop %v865
        %v867 = vmul.f32 %v843, 1.442695
        %v868 = vpow.pop %v867
        %v869 = vmul.f32 %v844, 1.442695
        %v870 = vpow.pop %v869
        %v871 = vmul.f32 %v845, 1.442695
        %v872 = vpow.pop %v871
        %v873 = vmul.f32 %v846, 1.442695
        %v874 = vpow.pop %v873
        %v875 = vmul.f32 %v847, 1.442695
        %v876 = vpow.pop %v875
        %v877 = vmul.f32 %v848, 1.442695
        %v878 = vpow.pop %v877
        %v879 = vmul.f32 %v849, 1.442695
        %v880 = vpow.pop %v879
        %v881 = vmul.f32 %v850, 1.442695
        %v882 = vpow.pop %v881
        %v883 = vld [vmem:[%s403] sm:$0xff]
        %v884 = vld [vmem:[%s403 + $0x8] sm:$0xff]
        %v885 = vld [vmem:[%s403 + $0x10] sm:$0xff]
        %v886 = vld [vmem:[%s403 + $0x18] sm:$0xff]
        %v887 = vld [vmem:[%s403 + $0x20] sm:$0xff]
        %v888 = vld [vmem:[%s403 + $0x28] sm:$0xff]
        %v889 = vld [vmem:[%s403 + $0x30] sm:$0xff]
        %v890 = vld [vmem:[%s403 + $0x38] sm:$0xff]
        %v891 = vld [vmem:[%s403 + $0x40] sm:$0xff]
        %v892 = vld [vmem:[%s403 + $0x48] sm:$0xff]
        %v893 = vld [vmem:[%s403 + $0x50] sm:$0xff]
        %v894 = vld [vmem:[%s403 + $0x58] sm:$0xff]
        %v895 = vld [vmem:[%s403 + $0x60] sm:$0xff]
        %v896 = vld [vmem:[%s403 + $0x68] sm:$0xff]
        %v897 = vld [vmem:[%s403 + $0x70] sm:$0xff]
        %v898 = vld [vmem:[%s403 + $0x78] sm:$0xff]
        %v899 = vmul.f32 %v724, %v883
        %v900 = vmul.f32 %v726, %v884
        %v901 = vmul.f32 %v728, %v885
        %v902 = vmul.f32 %v730, %v886
        %v903 = vmul.f32 %v732, %v887
        %v904 = vmul.f32 %v734, %v888
        %v905 = vmul.f32 %v736, %v889
        %v906 = vmul.f32 %v738, %v890
        %v907 = vmul.f32 %v740, %v891
        %v908 = vmul.f32 %v742, %v892
        %v909 = vmul.f32 %v744, %v893
        %v910 = vmul.f32 %v746, %v894
        %v911 = vmul.f32 %v748, %v895
        %v912 = vmul.f32 %v750, %v896
        %v913 = vmul.f32 %v752, %v897
        %v914 = vmul.f32 %v754, %v898
        %v915 = vsel %vm642, %v852, 0.0
        %916 = vadd.xlane.f32.xlu0 %v915
        %v917 = vpop.xlane.xlu0 %916
        %v918 = vsel %vm642, %v854, 0.0
        %919 = vadd.xlane.f32.xlu0 %v918
        %v920 = vpop.xlane.xlu0 %919
        %v921 = vsel %vm642, %v856, 0.0
        %922 = vadd.xlane.f32.xlu0 %v921
        %v923 = vpop.xlane.xlu0 %922
        %v924 = vsel %vm642, %v858, 0.0
        %925 = vadd.xlane.f32.xlu0 %v924
        %v926 = vpop.xlane.xlu0 %925
        %v927 = vsel %vm642, %v860, 0.0
        %928 = vadd.xlane.f32.xlu0 %v927
        %v929 = vpop.xlane.xlu0 %928
        %v930 = vsel %vm642, %v862, 0.0
        %931 = vadd.xlane.f32.xlu0 %v930
        %v932 = vpop.xlane.xlu0 %931
        %v933 = vsel %vm642, %v864, 0.0
        %934 = vadd.xlane.f32.xlu0 %v933
        %v935 = vpop.xlane.xlu0 %934
        %v936 = vsel %vm642, %v866, 0.0
        %937 = vadd.xlane.f32.xlu0 %v936
        %v938 = vpop.xlane.xlu0 %937
        %v939 = vsel %vm642, %v868, 0.0
        %940 = vadd.xlane.f32.xlu0 %v939
        %v941 = vpop.xlane.xlu0 %940
        %v942 = vsel %vm642, %v870, 0.0
        %943 = vadd.xlane.f32.xlu0 %v942
        %v944 = vpop.xlane.xlu0 %943
        %v945 = vsel %vm642, %v872, 0.0
        %946 = vadd.xlane.f32.xlu0 %v945
        %v947 = vpop.xlane.xlu0 %946
        %v948 = vsel %vm642, %v874, 0.0
        %949 = vadd.xlane.f32.xlu0 %v948
        %v950 = vpop.xlane.xlu0 %949
        %v951 = vsel %vm642, %v876, 0.0
        %952 = vadd.xlane.f32.xlu0 %v951
        %v953 = vpop.xlane.xlu0 %952
        %v954 = vsel %vm642, %v878, 0.0
        %955 = vadd.xlane.f32.xlu0 %v954
        %v956 = vpop.xlane.xlu0 %955
        %v957 = vsel %vm642, %v880, 0.0
        %958 = vadd.xlane.f32.xlu0 %v957
        %v959 = vpop.xlane.xlu0 %958
        %v960 = vsel %vm642, %v882, 0.0
        %961 = vadd.xlane.f32.xlu0 %v960
        %v962 = vpop.xlane.xlu0 %961
        %v963 = vadd.f32 %v899, %v917
        %v964 = vadd.f32 %v900, %v920
        %v965 = vadd.f32 %v901, %v923
        %v966 = vadd.f32 %v902, %v926
        %v967 = vadd.f32 %v903, %v929
        %v968 = vadd.f32 %v904, %v932
        %v969 = vadd.f32 %v905, %v935
        %v970 = vadd.f32 %v906, %v938
        %v971 = vadd.f32 %v907, %v941
        %v972 = vadd.f32 %v908, %v944
        %v973 = vadd.f32 %v909, %v947
        %v974 = vadd.f32 %v910, %v950
        %v975 = vadd.f32 %v911, %v953
        %v976 = vadd.f32 %v912, %v956
        %v977 = vadd.f32 %v913, %v959
        %v978 = vadd.f32 %v914, %v962
        %vm979 = vcmask 7168
        %980 = vst.msk [vmem:[%s403] sm:$0xff] %vm979, %v963
        %981 = vst.msk [vmem:[%s403 + $0x8] sm:$0xff] %vm979, %v964
        %982 = vst.msk [vmem:[%s403 + $0x10] sm:$0xff] %vm979, %v965
        %983 = vst.msk [vmem:[%s403 + $0x18] sm:$0xff] %vm979, %v966
        %984 = vst.msk [vmem:[%s403 + $0x20] sm:$0xff] %vm979, %v967
        %985 = vst.msk [vmem:[%s403 + $0x28] sm:$0xff] %vm979, %v968
        %986 = vst.msk [vmem:[%s403 + $0x30] sm:$0xff] %vm979, %v969
        %987 = vst.msk [vmem:[%s403 + $0x38] sm:$0xff] %vm979, %v970
        %988 = vst.msk [vmem:[%s403 + $0x40] sm:$0xff] %vm979, %v971
        %989 = vst.msk [vmem:[%s403 + $0x48] sm:$0xff] %vm979, %v972
        %990 = vst.msk [vmem:[%s403 + $0x50] sm:$0xff] %vm979, %v973
        %991 = vst.msk [vmem:[%s403 + $0x58] sm:$0xff] %vm979, %v974
        %992 = vst.msk [vmem:[%s403 + $0x60] sm:$0xff] %vm979, %v975
        %993 = vst.msk [vmem:[%s403 + $0x68] sm:$0xff] %vm979, %v976
        %994 = vst.msk [vmem:[%s403 + $0x70] sm:$0xff] %vm979, %v977
        %995 = vst.msk [vmem:[%s403 + $0x78] sm:$0xff] %vm979, %v978
        %v996 = vld [vmem:[%s359] sm:$0xff]
        %v997 = vld [vmem:[%s359 + $0x8] sm:$0xff]
        %v998 = vld [vmem:[%s359 + $0x10] sm:$0xff]
        %v999 = vld [vmem:[%s359 + $0x18] sm:$0xff]
        %v1000 = vld [vmem:[%s359 + $0x20] sm:$0xff]
        %v1001 = vld [vmem:[%s359 + $0x28] sm:$0xff]
        %v1002 = vld [vmem:[%s359 + $0x30] sm:$0xff]
        %v1003 = vld [vmem:[%s359 + $0x38] sm:$0xff]
        %v1004 = vld [vmem:[%s359 + $0x40] sm:$0xff]
        %v1005 = vld [vmem:[%s359 + $0x48] sm:$0xff]
        %v1006 = vld [vmem:[%s359 + $0x50] sm:$0xff]
        %v1007 = vld [vmem:[%s359 + $0x58] sm:$0xff]
        %v1008 = vld [vmem:[%s359 + $0x60] sm:$0xff]
        %v1009 = vld [vmem:[%s359 + $0x68] sm:$0xff]
        %v1010 = vld [vmem:[%s359 + $0x70] sm:$0xff]
        %v1011 = vld [vmem:[%s359 + $0x78] sm:$0xff]
        %1013 = vset.pattern.permute.xlu0 0
        %1014 = vperm.xlu0 %1013, %v724
        %v1015 = vpop.permute.xlu0 %1014
        %1018 = vset.pattern.permute.xlu0 0
        %1019 = vperm.xlu0 %1018, %v726
        %v1020 = vpop.permute.xlu0 %1019
        %1023 = vset.pattern.permute.xlu0 0
        %1024 = vperm.xlu0 %1023, %v728
        %v1025 = vpop.permute.xlu0 %1024
        %1028 = vset.pattern.permute.xlu0 0
        %1029 = vperm.xlu0 %1028, %v730
        %v1030 = vpop.permute.xlu0 %1029
        %1033 = vset.pattern.permute.xlu0 0
        %1034 = vperm.xlu0 %1033, %v732
        %v1035 = vpop.permute.xlu0 %1034
        %1038 = vset.pattern.permute.xlu0 0
        %1039 = vperm.xlu0 %1038, %v734
        %v1040 = vpop.permute.xlu0 %1039
        %1043 = vset.pattern.permute.xlu0 0
        %1044 = vperm.xlu0 %1043, %v736
        %v1045 = vpop.permute.xlu0 %1044
        %1048 = vset.pattern.permute.xlu0 0
        %1049 = vperm.xlu0 %1048, %v738
        %v1050 = vpop.permute.xlu0 %1049
        %1053 = vset.pattern.permute.xlu0 0
        %1054 = vperm.xlu0 %1053, %v740
        %v1055 = vpop.permute.xlu0 %1054
        %1058 = vset.pattern.permute.xlu0 0
        %1059 = vperm.xlu0 %1058, %v742
        %v1060 = vpop.permute.xlu0 %1059
        %1063 = vset.pattern.permute.xlu0 0
        %1064 = vperm.xlu0 %1063, %v744
        %v1065 = vpop.permute.xlu0 %1064
        %1068 = vset.pattern.permute.xlu0 0
        %1069 = vperm.xlu0 %1068, %v746
        %v1070 = vpop.permute.xlu0 %1069
        %1073 = vset.pattern.permute.xlu0 0
        %1074 = vperm.xlu0 %1073, %v748
        %v1075 = vpop.permute.xlu0 %1074
        %1078 = vset.pattern.permute.xlu0 0
        %1079 = vperm.xlu0 %1078, %v750
        %v1080 = vpop.permute.xlu0 %1079
        %1083 = vset.pattern.permute.xlu0 0
        %1084 = vperm.xlu0 %1083, %v752
        %v1085 = vpop.permute.xlu0 %1084
        %1088 = vset.pattern.permute.xlu0 0
        %1089 = vperm.xlu0 %1088, %v754
        %v1090 = vpop.permute.xlu0 %1089
        %v1092 = vmul.f32 %v1015, %v996
        %v1093 = vmul.f32 %v1020, %v997
        %v1094 = vmul.f32 %v1025, %v998
        %v1095 = vmul.f32 %v1030, %v999
        %v1096 = vmul.f32 %v1035, %v1000
        %v1097 = vmul.f32 %v1040, %v1001
        %v1098 = vmul.f32 %v1045, %v1002
        %v1099 = vmul.f32 %v1050, %v1003
        %v1100 = vmul.f32 %v1055, %v1004
        %v1101 = vmul.f32 %v1060, %v1005
        %v1102 = vmul.f32 %v1065, %v1006
        %v1103 = vmul.f32 %v1070, %v1007
        %v1104 = vmul.f32 %v1075, %v1008
        %v1105 = vmul.f32 %v1080, %v1009
        %v1106 = vmul.f32 %v1085, %v1010
        %v1107 = vmul.f32 %v1090, %v1011
        %v1109 = vsel %vm642, %v852, 0
        %v1112 = vsel %vm642, %v854, 0
        %v1115 = vsel %vm642, %v856, 0
        %v1118 = vsel %vm642, %v858, 0
        %v1121 = vsel %vm642, %v860, 0
        %v1124 = vsel %vm642, %v862, 0
        %v1127 = vsel %vm642, %v864, 0
        %v1130 = vsel %vm642, %v866, 0
        %v1133 = vsel %vm642, %v868, 0
        %v1136 = vsel %vm642, %v870, 0
        %v1139 = vsel %vm642, %v872, 0
        %v1142 = vsel %vm642, %v874, 0
        %v1145 = vsel %vm642, %v876, 0
        %v1148 = vsel %vm642, %v878, 0
        %v1151 = vsel %vm642, %v880, 0
        %v1154 = vsel %vm642, %v882, 0
        %1156 = vmatprep.subr.mxu0 0.0
        %1157 = vmatpush1.msra.mxu0 0.0
        %1158 = vmatprep.subr.mxu0 0.0
        %1159 = vmatpush1.msra.mxu0 0.0
        %1160 = vmatprep.subr.mxu0 0.0
        %1161 = vmatpush1.msra.mxu0 0.0
        %1162 = vmatprep.subr.mxu0 0.0
        %1163 = vmatpush1.msra.mxu0 0.0
        %1164 = vmatprep.subr.mxu0 0.0
        %1165 = vmatpush1.msra.mxu0 0.0
        %1166 = vmatprep.subr.mxu0 0.0
        %1167 = vmatpush1.msra.mxu0 0.0
        %1168 = vmatprep.subr.mxu0 0.0
        %1169 = vmatpush1.msra.mxu0 0.0
        %1170 = vmatprep.subr.mxu0 0.0
        %1171 = vmatpush1.msra.mxu0 0.0
        %1172 = vmatprep.subr.mxu0 0.0
        %1173 = vmatpush1.msra.mxu0 0.0
        %1174 = vmatprep.subr.mxu0 0.0
        %1175 = vmatpush1.msra.mxu0 0.0
        %1176 = vmatprep.subr.mxu0 0.0
        %1177 = vmatpush1.msra.mxu0 0.0
        %1178 = vmatprep.subr.mxu0 0.0
        %1179 = vmatpush1.msra.mxu0 0.0
        %1180 = vmatprep.subr.mxu0 0.0
        %1181 = vmatpush1.msra.mxu0 %v464
        %1182 = vmatprep.subr.mxu0 0.0
        %1183 = vmatpush1.msra.mxu0 %v463
        %1184 = vmatprep.subr.mxu0 0.0
        %1185 = vmatpush1.msra.mxu0 %v462
        %1186 = vmatprep.subr.mxu0 0.0
        %1187 = vmatpush1.msra.mxu0 %v461
        %1188 = vmatprep.subr.mxu0 0.0
        %1189 = vmatpush2.msra.mxu0 0.0
        %1190 = vmatprep.subr.mxu0 0.0
        %1191 = vmatpush2.msra.mxu0 0.0
        %1192 = vmatprep.subr.mxu0 0.0
        %1193 = vmatpush2.msra.mxu0 0.0
        %1194 = vmatprep.subr.mxu0 0.0
        %1195 = vmatpush2.msra.mxu0 0.0
        %1196 = vmatprep.subr.mxu0 0.0
        %1197 = vmatpush2.msra.mxu0 0.0
        %1198 = vmatprep.subr.mxu0 0.0
        %1199 = vmatpush2.msra.mxu0 0.0
        %1200 = vmatprep.subr.mxu0 0.0
        %1201 = vmatpush2.msra.mxu0 0.0
        %1202 = vmatprep.subr.mxu0 0.0
        %1203 = vmatpush2.msra.mxu0 0.0
        %1204 = vmatprep.subr.mxu0 0.0
        %1205 = vmatpush2.msra.mxu0 0.0
        %1206 = vmatprep.subr.mxu0 0.0
        %1207 = vmatpush2.msra.mxu0 0.0
        %1208 = vmatprep.subr.mxu0 0.0
        %1209 = vmatpush2.msra.mxu0 0.0
        %1210 = vmatprep.subr.mxu0 0.0
        %1211 = vmatpush2.msra.mxu0 0.0
        %1212 = vmatprep.subr.mxu0 0.0
        %1213 = vmatpush2.msra.mxu0 0.0
        %1214 = vmatprep.subr.mxu0 0.0
        %1215 = vmatpush2.msra.mxu0 0.0
        %1216 = vmatprep.subr.mxu0 0.0
        %1217 = vmatpush2.msra.mxu0 0.0
        %1218 = vmatprep.subr.mxu0 0.0
        %1219 = vmatpush2.msra.mxu0 0.0
        %1220 = vmatprep.mubr.f32.mxu0 0.0
        %1221 = vmatmul.mubr.f32.gmra.mxu0 %v1109
        %v1222 = vpop.f32.mrf.mxu0
        %v1223 = vadd.f32 0.0, %v1222
        %v1224 = vpop.f32.mrf.mxu0
        %1225 = vmatprep.mubr.f32.mxu0 0.0
        %1226 = vmatmul.mubr.f32.gmra.mxu0 %v1112
        %v1227 = vpop.f32.mrf.mxu0
        %v1228 = vadd.f32 0.0, %v1227
        %v1229 = vpop.f32.mrf.mxu0
        %1230 = vmatprep.mubr.f32.mxu0 0.0
        %1231 = vmatmul.mubr.f32.gmra.mxu0 %v1115
        %v1232 = vpop.f32.mrf.mxu0
        %v1233 = vadd.f32 0.0, %v1232
        %v1234 = vpop.f32.mrf.mxu0
        %1235 = vmatprep.mubr.f32.mxu0 0.0
        %1236 = vmatmul.mubr.f32.gmra.mxu0 %v1118
        %v1237 = vpop.f32.mrf.mxu0
        %v1238 = vadd.f32 0.0, %v1237
        %v1239 = vpop.f32.mrf.mxu0
        %1240 = vmatprep.mubr.f32.mxu0 0.0
        %1241 = vmatmul.mubr.f32.gmra.mxu0 %v1121
        %v1242 = vpop.f32.mrf.mxu0
        %v1243 = vadd.f32 0.0, %v1242
        %v1244 = vpop.f32.mrf.mxu0
        %1245 = vmatprep.mubr.f32.mxu0 0.0
        %1246 = vmatmul.mubr.f32.gmra.mxu0 %v1124
        %v1247 = vpop.f32.mrf.mxu0
        %v1248 = vadd.f32 0.0, %v1247
        %v1249 = vpop.f32.mrf.mxu0
        %1250 = vmatprep.mubr.f32.mxu0 0.0
        %1251 = vmatmul.mubr.f32.gmra.mxu0 %v1127
        %v1252 = vpop.f32.mrf.mxu0
        %v1253 = vadd.f32 0.0, %v1252
        %v1254 = vpop.f32.mrf.mxu0
        %1255 = vmatprep.mubr.f32.mxu0 0.0
        %1256 = vmatmul.mubr.f32.gmra.mxu0 %v1130
        %v1257 = vpop.f32.mrf.mxu0
        %v1258 = vadd.f32 0.0, %v1257
        %v1259 = vpop.f32.mrf.mxu0
        %1260 = vmatprep.mubr.f32.mxu0 0.0
        %1261 = vmatmul.mubr.f32.gmra.mxu0 %v1133
        %v1262 = vpop.f32.mrf.mxu0
        %v1263 = vadd.f32 0.0, %v1262
        %v1264 = vpop.f32.mrf.mxu0
        %1265 = vmatprep.mubr.f32.mxu0 0.0
        %1266 = vmatmul.mubr.f32.gmra.mxu0 %v1136
        %v1267 = vpop.f32.mrf.mxu0
        %v1268 = vadd.f32 0.0, %v1267
        %v1269 = vpop.f32.mrf.mxu0
        %1270 = vmatprep.mubr.f32.mxu0 0.0
        %1271 = vmatmul.mubr.f32.gmra.mxu0 %v1139
        %v1272 = vpop.f32.mrf.mxu0
        %v1273 = vadd.f32 0.0, %v1272
        %v1274 = vpop.f32.mrf.mxu0
        %1275 = vmatprep.mubr.f32.mxu0 0.0
        %1276 = vmatmul.mubr.f32.gmra.mxu0 %v1142
        %v1277 = vpop.f32.mrf.mxu0
        %v1278 = vadd.f32 0.0, %v1277
        %v1279 = vpop.f32.mrf.mxu0
        %1280 = vmatprep.mubr.f32.mxu0 0.0
        %1281 = vmatmul.mubr.f32.gmra.mxu0 %v1145
        %v1282 = vpop.f32.mrf.mxu0
        %v1283 = vadd.f32 0.0, %v1282
        %v1284 = vpop.f32.mrf.mxu0
        %1285 = vmatprep.mubr.f32.mxu0 0.0
        %1286 = vmatmul.mubr.f32.gmra.mxu0 %v1148
        %v1287 = vpop.f32.mrf.mxu0
        %v1288 = vadd.f32 0.0, %v1287
        %v1289 = vpop.f32.mrf.mxu0
        %1290 = vmatprep.mubr.f32.mxu0 0.0
        %1291 = vmatmul.mubr.f32.gmra.mxu0 %v1151
        %v1292 = vpop.f32.mrf.mxu0
        %v1293 = vadd.f32 0.0, %v1292
        %v1294 = vpop.f32.mrf.mxu0
        %1295 = vmatprep.mubr.f32.mxu0 0.0
        %1296 = vmatmul.mubr.f32.gmra.mxu0 %v1154
        %v1297 = vpop.f32.mrf.mxu0
        %v1298 = vadd.f32 0.0, %v1297
        %v1299 = vpop.f32.mrf.mxu0
        %1300 = vdwg.mxu0
        %v1301 = vadd.f32 %v1092, %v1223
        %v1302 = vadd.f32 %v1093, %v1228
        %v1303 = vadd.f32 %v1094, %v1233
        %v1304 = vadd.f32 %v1095, %v1238
        %v1305 = vadd.f32 %v1096, %v1243
        %v1306 = vadd.f32 %v1097, %v1248
        %v1307 = vadd.f32 %v1098, %v1253
        %v1308 = vadd.f32 %v1099, %v1258
        %v1309 = vadd.f32 %v1100, %v1263
        %v1310 = vadd.f32 %v1101, %v1268
        %v1311 = vadd.f32 %v1102, %v1273
        %v1312 = vadd.f32 %v1103, %v1278
        %v1313 = vadd.f32 %v1104, %v1283
        %v1314 = vadd.f32 %v1105, %v1288
        %v1315 = vadd.f32 %v1106, %v1293
        %v1316 = vadd.f32 %v1107, %v1298
        %1317 = vst [vmem:[%s359] sm:$0xff] %v1301
        %1318 = vst [vmem:[%s359 + $0x8] sm:$0xff] %v1302
        %1319 = vst [vmem:[%s359 + $0x10] sm:$0xff] %v1303
        %1320 = vst [vmem:[%s359 + $0x18] sm:$0xff] %v1304
        %1321 = vst [vmem:[%s359 + $0x20] sm:$0xff] %v1305
        %1322 = vst [vmem:[%s359 + $0x28] sm:$0xff] %v1306
        %1323 = vst [vmem:[%s359 + $0x30] sm:$0xff] %v1307
        %1324 = vst [vmem:[%s359 + $0x38] sm:$0xff] %v1308
        %1325 = vst [vmem:[%s359 + $0x40] sm:$0xff] %v1309
        %1326 = vst [vmem:[%s359 + $0x48] sm:$0xff] %v1310
        %1327 = vst [vmem:[%s359 + $0x50] sm:$0xff] %v1311
        %1328 = vst [vmem:[%s359 + $0x58] sm:$0xff] %v1312
        %1329 = vst [vmem:[%s359 + $0x60] sm:$0xff] %v1313
        %1330 = vst [vmem:[%s359 + $0x68] sm:$0xff] %v1314
        %1331 = vst [vmem:[%s359 + $0x70] sm:$0xff] %v1315
        %1332 = vst [vmem:[%s359 + $0x78] sm:$0xff] %v1316
        %1333 = vst.msk [vmem:[%s394] sm:$0xff] %vm979, %v691
        %1334 = vst.msk [vmem:[%s394 + $0x8] sm:$0xff] %vm979, %v692
        %1335 = vst.msk [vmem:[%s394 + $0x10] sm:$0xff] %vm979, %v693
        %1336 = vst.msk [vmem:[%s394 + $0x18] sm:$0xff] %vm979, %v694
        %1337 = vst.msk [vmem:[%s394 + $0x20] sm:$0xff] %vm979, %v695
        %1338 = vst.msk [vmem:[%s394 + $0x28] sm:$0xff] %vm979, %v696
        %1339 = vst.msk [vmem:[%s394 + $0x30] sm:$0xff] %vm979, %v697
        %1340 = vst.msk [vmem:[%s394 + $0x38] sm:$0xff] %vm979, %v698
        %1341 = vst.msk [vmem:[%s394 + $0x40] sm:$0xff] %vm979, %v699
        %1342 = vst.msk [vmem:[%s394 + $0x48] sm:$0xff] %vm979, %v700
        %1343 = vst.msk [vmem:[%s394 + $0x50] sm:$0xff] %vm979, %v701
        %1344 = vst.msk [vmem:[%s394 + $0x58] sm:$0xff] %vm979, %v702
        %1345 = vst.msk [vmem:[%s394 + $0x60] sm:$0xff] %vm979, %v703
        %1346 = vst.msk [vmem:[%s394 + $0x68] sm:$0xff] %vm979, %v704
        %1347 = vst.msk [vmem:[%s394 + $0x70] sm:$0xff] %vm979, %v705
        %1348 = vst.msk [vmem:[%s394 + $0x78] sm:$0xff] %vm979, %v706
        %s1349 = sand.u32 %s141, 1
        %s1350 = scalar_lea.sflag [#allocation4], %s1349
        %s1351 = sand.u32 %s141, 1
        %s1352 = smul.addr %s1351, 128
        %s1353 = scalar_lea.vmem [#allocation8], %s1352
        %p1354 = scmp.lt.s32.totalorder %s31, 1
        %s1355 = scalar_select %p1354, %s31, 1
        %p1356 = scmp.lt.s32.totalorder %s32, 0
        %s1357 = scalar_select %p1356, %s32, 0
        %s1358 = smul.addr %s1357, 16
        %s1359 = smul.addr %s1355, 16
        %s1360 = sadd.s32 %s1358, %s1359
        %s1361 = smul.addr %s1360, 8
        %s1362 = scalar_lea.vmem %s4, %s1361
        %p1363 = scmp.lt.s32.totalorder %s31, 1
        %s1364 = scalar_select %p1363, %s31, 1
        %p1365 = scmp.lt.s32.totalorder %s32, 0
        %s1366 = scalar_select %p1365, %s32, 0
        %s1367 = smul.addr %s1366, 16
        %s1368 = smul.addr %s1364, 16
        %s1369 = sadd.s32 %s1367, %s1368
        %s1370 = smul.addr %s1369, 8
        %s1371 = scalar_lea.vmem %s5, %s1370
        // Predicated region
        $region49: #{tpu_custom_call.1} parent=31 // pred_check
          %p1372 = pneg %p151
        $region50: #{tpu_custom_call.1} parent=31 // pred_check_branch
          %1374 = sbr.rel (%p1372) target = $region52
        $region51: #{tpu_custom_call.1} parent=31 // pred_region
          %s1376 = ssub.s32 2048, 2048
          %1377 = vsyncadd %s1350, %s1376
          %s1378 = smul.addr %s32, 16
          %s1379 = smul.addr %s31, 16
          %s1380 = sadd.s32 %s1378, %s1379
          %s1381 = smul.addr %s1380, 128
          %s1382 = scalar_lea.hbm %s3, %s1381
          %s1383 = sshll.u32 %s1353, 4
          %s1384 = int_to_ptr.vmem [resolvable:$true] %s1383
          %1389 = dma.vmem_to_hbm [thread:$0]  %s1384, 2048, %s1382, %s1350, 128, 128, 8
        $region52: #{tpu_custom_call.1} parent=31 // pred_fallthru
          _
        // Predicated region
        $region53: #{tpu_custom_call.1} parent=31 // pred_check
          %p1390 = pneg %p179
        $region54: #{tpu_custom_call.1} parent=31 // pred_check_branch
          %1392 = sbr.rel (%p1390) target = $region56
        $region55: #{tpu_custom_call.1} parent=31 // pred_region
          _
        $region56: #{tpu_custom_call.1} parent=31 // pred_fallthru
          _
        // Predicated region
        $region57: #{tpu_custom_call.1} parent=31 // pred_check
          %p1393 = pneg %p207
        $region58: #{tpu_custom_call.1} parent=31 // pred_check_branch
          %1395 = sbr.rel (%p1393) target = $region60
        $region59: #{tpu_custom_call.1} parent=31 // pred_region
          _
        $region60: #{tpu_custom_call.1} parent=31 // pred_fallthru
          _
      $region32: #{tpu_custom_call.1} parent=5 // pred_fallthru
        _
      %p1396 = scmp.le.s32.totalorder 2, %s21
      // Predicated region
      $region61: #{tpu_custom_call.1} parent=5 // pred_check
        %p1397 = pneg %p1396
      $region62: #{tpu_custom_call.1} parent=5 // pred_check_branch
        %1399 = sbr.rel (%p1397) target = $region64
      $region63: #{tpu_custom_call.1} parent=5 // pred_region
        %s1400 = ssub.s32 %s21, 2
        // Predicated region
        $region65: #{tpu_custom_call.1} parent=63 // pred_check
          %p1401 = pneg %p157
        $region66: #{tpu_custom_call.1} parent=63 // pred_check_branch
          %1403 = sbr.rel (%p1401) target = $region68
        $region67: #{tpu_custom_call.1} parent=63 // pred_region
          %s1404 = sand.u32 %s142, 1
          %s1405 = scalar_lea.sflag [#allocation4], %s1404
          %s1406 = sand.u32 %s142, 1
          %s1407 = smul.addr %s1406, 128
          %s1408 = scalar_lea.vmem [#allocation8], %s1407
          %1409 = dma.done %s1405, 2048
        $region68: #{tpu_custom_call.1} parent=63 // pred_fallthru
          _
        // Predicated region
        $region69: #{tpu_custom_call.1} parent=63 // pred_check
          %p1410 = pneg %p185
        $region70: #{tpu_custom_call.1} parent=63 // pred_check_branch
          %1412 = sbr.rel (%p1410) target = $region72
        $region71: #{tpu_custom_call.1} parent=63 // pred_region
          %p1413 = scmp.lt.s32.totalorder %s34, 1
          %s1414 = scalar_select %p1413, %s34, 1
          %p1415 = scmp.lt.s32.totalorder %s35, 0
          %s1416 = scalar_select %p1415, %s35, 0
          %s1417 = smul.addr %s1416, 16
          %s1418 = smul.addr %s1414, 16
          %s1419 = sadd.s32 %s1417, %s1418
          %s1420 = smul.addr %s1419, 8
          %s1421 = scalar_lea.vmem %s4, %s1420
        $region72: #{tpu_custom_call.1} parent=63 // pred_fallthru
          _
        // Predicated region
        $region73: #{tpu_custom_call.1} parent=63 // pred_check
          %p1422 = pneg %p213
        $region74: #{tpu_custom_call.1} parent=63 // pred_check_branch
          %1424 = sbr.rel (%p1422) target = $region76
        $region75: #{tpu_custom_call.1} parent=63 // pred_region
          %p1425 = scmp.lt.s32.totalorder %s34, 1
          %s1426 = scalar_select %p1425, %s34, 1
          %p1427 = scmp.lt.s32.totalorder %s35, 0
          %s1428 = scalar_select %p1427, %s35, 0
          %s1429 = smul.addr %s1428, 16
          %s1430 = smul.addr %s1426, 16
          %s1431 = sadd.s32 %s1429, %s1430
          %s1432 = smul.addr %s1431, 8
          %s1433 = scalar_lea.vmem %s5, %s1432
        $region76: #{tpu_custom_call.1} parent=63 // pred_fallthru
          _
      $region64: #{tpu_custom_call.1} parent=5 // pred_fallthru
        _
    $region6: #{tpu_custom_call.1} parent=1 // loop_footer
      %s25 = sadd.s32 1, %s21
    $region7: #{tpu_custom_call.1} parent=1 // loop_footer_branch
      %20 = sbr.rel target = $region3
    $region8: #{tpu_custom_call.1} parent=1 // loop_exit
      _
    %1434 = vsyncpa [#allocation3], 1
    %s1435 = scalar_lea.sflag [#allocation3], 1
    %1436 = vsyncpa %s1435, 1
    %1437 = vsyncpa [#allocation6], 1
    %s1438 = scalar_lea.sflag [#allocation6], 1
    %1439 = vsyncpa %s1438, 1
    %1440 = vsyncpa [#allocation4], 1
    %s1441 = scalar_lea.sflag [#allocation4], 1
    %1442 = vsyncpa %s1441, 1

</llo_original>
